<compile_context>
chip_gen: v6e
topology: v6e:2x2x1
jax: 0.10.0
libtpu: 0.0.40
codegen_flags: <defaults>
</compile_context>

<pallas_src>
import jax
import jax.numpy as jnp
from jax.experimental import pallas as pl
from jax.experimental.pallas import tpu as pltpu

# Small, lane-aligned T5-shaped config.
BATCH = 2
SEQ = 16          # stands in for max_length=512
D_MODEL = 128     # lane-dense (multiple of 128)
N_HEADS = 4
D_HEAD = D_MODEL // N_HEADS
D_FF = 256
N_LAYERS = 2
VOCAB = 128
NUM_BUCKETS = 32
MAX_DISTANCE = 128
EPS = 1e-6


# ----------------------------------------------------------------------------
# In-kernel helpers
# ----------------------------------------------------------------------------
def _rmsnorm(x, w):
  # T5 LayerNorm: no mean subtraction, no bias; f32 math.
  var = jnp.mean(x * x, axis=-1, keepdims=True)
  return x * jax.lax.rsqrt(var + EPS) * w


# ----------------------------------------------------------------------------
# Pallas kernel: one (batch row, layer) step of the encoder
# ----------------------------------------------------------------------------
def encoder_kernel(x_ref, bias_ref, ln1_ref, wqkv_ref, wo_ref, ln2_ref,
                   wi_ref, wof_ref, fln_ref, o_ref, acc_ref):
  l = pl.program_id(1)
  n_layers = pl.num_programs(1)
  S, D = acc_ref.shape
  H = bias_ref.shape[0]
  DH = D // H
  bf16 = jnp.bfloat16

  # Layer 0: load this batch row's token embeddings into the resident
  # activation scratch (kept in VMEM across the whole layer axis).
  @pl.when(l == 0)
  def _():
    acc_ref[...] = x_ref[...]

  x = acc_ref[...]                                           # (S, D) f32

  # ---------------- self-attention block (pre-RMSNorm, residual) ----------
  h = _rmsnorm(x, ln1_ref[...].reshape(1, D))                # (S, D) f32
  # One full-width fused QKV projection on the MXU: (S, D) x (D, 3D).
  qkv = jnp.dot(h.astype(bf16), wqkv_ref[0],
                preferred_element_type=jnp.float32)          # (S, 3D) f32

  # Split heads with static lane slices; batch them as (H, S, DH) for the
  # per-head score/context contractions (no replication copies).
  def split_heads(z):                                        # (S, D)->(H,S,DH)
    return jnp.stack([z[:, hd * DH:(hd + 1) * DH] for hd in range(H)], axis=0)

  q = split_heads(qkv[:, 0 * D:1 * D]).astype(bf16)
  k = split_heads(qkv[:, 1 * D:2 * D]).astype(bf16)
  v = split_heads(qkv[:, 2 * D:3 * D]).astype(bf16)

  # T5 does NOT scale scores by 1/sqrt(d_head).  The grid handles one batch
  # row per step, so the (H, S, S) position bias is added directly.
  s = jnp.einsum('hqd,hkd->hqk', q, k,
                 preferred_element_type=jnp.float32)         # (H, S, S) f32
  s = s + bias_ref[...]
  s = s - jnp.max(s, axis=-1, keepdims=True)
  p = jnp.exp(s)
  p = p / jnp.sum(p, axis=-1, keepdims=True)                 # exact divide

  ctx = jnp.einsum('hqk,hkd->hqd', p.astype(bf16), v,
                   preferred_element_type=jnp.float32)       # (H, S, DH) f32
  # Re-interleave heads on the lane axis and apply the un-split (D, D)
  # output projection as a single full-width matmul.
  ctx2d = jnp.concatenate([ctx[hd] for hd in range(H)], axis=-1)   # (S, D)
  attn = jnp.dot(ctx2d.astype(bf16), wo_ref[0],
                 preferred_element_type=jnp.float32)         # (S, D)
  x = x + attn

  # ---------------- feed-forward block (pre-RMSNorm, ReLU, residual) ------
  h = _rmsnorm(x, ln2_ref[...].reshape(1, D))
  u = jnp.maximum(jnp.dot(h.astype(bf16), wi_ref[0],
                          preferred_element_type=jnp.float32), 0.0)
  x = x + jnp.dot(u.astype(bf16), wof_ref[0],
                  preferred_element_type=jnp.float32)

  acc_ref[...] = x

  # ---------------- final RMSNorm + mean pool over the sequence dim -------
  @pl.when(l == n_layers - 1)
  def _():
    hf = _rmsnorm(x, fln_ref[...])                           # (S, D)
    o_ref[...] = jnp.mean(hf, axis=0, keepdims=True).reshape(o_ref.shape)


# ----------------------------------------------------------------------------
# Glue: embedding gather + T5 relative-position bias (plain JAX)
# ----------------------------------------------------------------------------
def relative_position_bucket(rel_pos, num_buckets=NUM_BUCKETS,
                             max_distance=MAX_DISTANCE):
  # Bidirectional bucketing, as in HF T5.
  num_buckets = num_buckets // 2
  buckets = (rel_pos > 0).astype(jnp.int32) * num_buckets
  rel_pos = jnp.abs(rel_pos)
  max_exact = num_buckets // 2
  is_small = rel_pos < max_exact
  safe = jnp.maximum(rel_pos, 1).astype(jnp.float32)
  large = max_exact + (
      jnp.log(safe / max_exact) / jnp.log(max_distance / max_exact)
      * (num_buckets - max_exact)).astype(jnp.int32)
  large = jnp.minimum(large, num_buckets - 1)
  return buckets + jnp.where(is_small, rel_pos, large)


def compute_position_bias(rel_bias_emb, seq_len):
  ctx = jnp.arange(seq_len)[:, None]
  mem = jnp.arange(seq_len)[None, :]
  buckets = relative_position_bucket(mem - ctx)               # (S, S)
  bias = rel_bias_emb[buckets]                                # (S, S, H)
  return jnp.transpose(bias, (2, 0, 1)).astype(jnp.float32)   # (H, S, S)


def _stack_layer_weights(layers):
  """Stack per-layer weights: bf16 MXU operands, f32 norm scales."""
  def stack(name, dtype):
    return jnp.stack([lyr[name] for lyr in layers], axis=0).astype(dtype)

  # Fused QKV weight so the in-kernel projection is one (D, 3D) matmul.
  wqkv = jnp.concatenate(
      [stack("wq", jnp.bfloat16), stack("wk", jnp.bfloat16),
       stack("wv", jnp.bfloat16)], axis=-1)                   # (L, D, 3D)
  return {
      "ln1": stack("ln1", jnp.float32),                       # (L, 1, D)
      "wqkv": wqkv,                                           # (L, D, 3D)
      "wo": stack("wo", jnp.bfloat16),                        # (L, D, D)
      "ln2": stack("ln2", jnp.float32),                       # (L, 1, D)
      "wi": stack("wi", jnp.bfloat16),                        # (L, D, F)
      "wof": stack("wof", jnp.bfloat16),                      # (L, F, D)
  }


@jax.jit
def text_encoder_forward(ids, params):
  B, S = ids.shape
  D, F, H, L = D_MODEL, D_FF, N_HEADS, N_LAYERS
  # Embedding gather + relative-position bucket table stay in plain JAX.
  x = params["embed"][ids].astype(jnp.float32).reshape(B * S, D)
  bias = compute_position_bias(params["rel_bias"], S)          # (H, S, S)
  sw = _stack_layer_weights(params["layers"])

  out = pl.pallas_call(
      encoder_kernel,
      out_shape=jax.ShapeDtypeStruct((B, 1, D), jnp.float32),
      grid_spec=pltpu.PrefetchScalarGridSpec(
          num_scalar_prefetch=0,
          grid=(B, L),
          in_specs=[
              pl.BlockSpec((S, D), lambda b, l: (b, 0)),            # x row b
              pl.BlockSpec((H, S, S), lambda b, l: (0, 0, 0)),      # pos bias
              pl.BlockSpec((1, 1, D), lambda b, l: (l, 0, 0)),      # ln1[l]
              pl.BlockSpec((1, D, 3 * D), lambda b, l: (l, 0, 0)),  # Wqkv[l]
              pl.BlockSpec((1, D, D), lambda b, l: (l, 0, 0)),      # Wo[l]
              pl.BlockSpec((1, 1, D), lambda b, l: (l, 0, 0)),      # ln2[l]
              pl.BlockSpec((1, D, F), lambda b, l: (l, 0, 0)),      # Wi[l]
              pl.BlockSpec((1, F, D), lambda b, l: (l, 0, 0)),      # Wo_ff[l]
              pl.BlockSpec((1, D), lambda b, l: (0, 0)),            # final LN
          ],
          out_specs=pl.BlockSpec((1, 1, D), lambda b, l: (b, 0, 0)),
          scratch_shapes=[pltpu.VMEM((S, D), jnp.float32)],
      ),
      compiler_params=pltpu.CompilerParams(
          # Batch shards across TensorCores (v7x megacore); the layer axis
          # carries the resident-activation accumulator so it is "arbitrary".
          dimension_semantics=("parallel", "arbitrary"),
          # Plenty at these shapes; must be set explicitly when scaling to
          # real t5-small sizes (default scoped VMEM is 16/32 MiB on v5e/v6e).
          vmem_limit_bytes=32 * 1024 * 1024,
      ),
  )(x, bias, sw["ln1"], sw["wqkv"], sw["wo"], sw["ln2"], sw["wi"], sw["wof"],
    params["final_ln"])
  return out.reshape(B, D)


# ----------------------------------------------------------------------------
# Pure-JAX reference mirroring the kernel's dtype policy (bf16 MXU operands,
# f32 accumulation, f32 norm/softmax) for correctness checking.
# ----------------------------------------------------------------------------
def ref_forward(ids, params):
  bf16 = jnp.bfloat16
  B, S = ids.shape

  def rms(x, w):
    var = jnp.mean(x * x, axis=-1, keepdims=True)
    return x * jax.lax.rsqrt(var + EPS) * w

  def mm(a, b):
    return jnp.einsum('...ij,jk->...ik', a.astype(bf16), b.astype(bf16),
                      preferred_element_type=jnp.float32)

  x = params["embed"][ids].astype(jnp.float32)                 # (B, S, D)
  bias = compute_position_bias(params["rel_bias"], S)          # (H, S, S)
  for lyr in params["layers"]:
    h = rms(x, lyr["ln1"])
    q = mm(h, lyr["wq"]).reshape(B, S, N_HEADS, D_HEAD).transpose(0, 2, 1, 3)
    k = mm(h, lyr["wk"]).reshape(B, S, N_HEADS, D_HEAD).transpose(0, 2, 1, 3)
    v = mm(h, lyr["wv"]).reshape(B, S, N_HEADS, D_HEAD).transpose(0, 2, 1, 3)
    s = jnp.einsum('bhqd,bhkd->bhqk', q.astype(bf16), k.astype(bf16),
                   preferred_element_type=jnp.float32) + bias[None]
    s = s - jnp.max(s, axis=-1, keepdims=True)
    p = jnp.exp(s)
    p = p / jnp.sum(p, axis=-1, keepdims=True)
    ctx = jnp.einsum('bhqk,bhkd->bhqd', p.astype(bf16), v.astype(bf16),
                     preferred_element_type=jnp.float32)
    ctx = ctx.transpose(0, 2, 1, 3).reshape(B, S, D_MODEL)
    x = x + mm(ctx, lyr["wo"])
    h = rms(x, lyr["ln2"])
    u = jnp.maximum(mm(h, lyr["wi"]), 0.0)
    x = x + mm(u, lyr["wof"])
  return jnp.mean(rms(x, params["final_ln"]), axis=1)


# ----------------------------------------------------------------------------
# Deterministic parameter init (synthetic stand-in for t5-small weights)
# ----------------------------------------------------------------------------
def init_params(key):
  n_keys = 3 + 8 * N_LAYERS
  keys = iter(jax.random.split(key, n_keys))

  def w(shape, scale=0.05):
    return jax.random.normal(next(keys), shape, dtype=jnp.float32) * scale

  params = {
      "embed": w((VOCAB, D_MODEL), 0.5),
      "rel_bias": w((NUM_BUCKETS, N_HEADS), 0.1),
      "final_ln": 1.0 + w((1, D_MODEL), 0.05),
      "layers": [],
  }
  for _ in range(N_LAYERS):
    params["layers"].append({
        "ln1": 1.0 + w((1, D_MODEL), 0.05),
        "wq": w((D_MODEL, D_MODEL)),
        "wk": w((D_MODEL, D_MODEL)),
        "wv": w((D_MODEL, D_MODEL)),
        "wo": w((D_MODEL, D_MODEL)),
        "ln2": 1.0 + w((1, D_MODEL), 0.05),
        "wi": w((D_MODEL, D_FF)),
        "wof": w((D_FF, D_MODEL)),
    })
  return params


if __name__ == "__main__":
  root = jax.random.PRNGKey(0)
  pkey, ikey = jax.random.split(root)
  params = init_params(pkey)
  # Synthetic "tokenized" ids in place of T5Tokenizer output.
  ids = jax.random.randint(ikey, (BATCH, SEQ), 0, VOCAB, dtype=jnp.int32)

  out = jax.block_until_ready(text_encoder_forward(ids, params))
  assert out.shape == (BATCH, D_MODEL), out.shape

  ref = jax.block_until_ready(jax.jit(ref_forward)(ids, params))
  if not jnp.allclose(out, ref, atol=1e-4, rtol=1e-4):
    max_err = jnp.max(jnp.abs(out - ref))
    raise AssertionError(f"Pallas output mismatch vs JAX reference: {max_err}")

  print("KERNEL_OK")
</pallas_src>

<mosaic_0001>
module attributes {stable_mosaic.version = 11 : i64} {
  func.func @encoder_kernel(%arg0: i32, %arg1: i32, %arg2: memref<16x128xf32, #tpu.memory_space<vmem>>, %arg3: memref<4x16x16xf32, #tpu.memory_space<vmem>>, %arg4: memref<1x1x128xf32, #tpu.memory_space<vmem>>, %arg5: memref<1x128x384xbf16, #tpu.memory_space<vmem>>, %arg6: memref<1x128x128xbf16, #tpu.memory_space<vmem>>, %arg7: memref<1x1x128xf32, #tpu.memory_space<vmem>>, %arg8: memref<1x128x256xbf16, #tpu.memory_space<vmem>>, %arg9: memref<1x256x128xbf16, #tpu.memory_space<vmem>>, %arg10: memref<1x128xf32, #tpu.memory_space<vmem>>, %arg11: memref<1x1x128xf32, #tpu.memory_space<vmem>>, %arg12: memref<16x128xf32, #tpu.memory_space<vmem>>) attributes {dimension_semantics = [#tpu.dimension_semantics<parallel>, #tpu.dimension_semantics<arbitrary>], iteration_bounds = array<i64: 2, 2>, scalar_prefetch = 0 : i64, scratch_operands = 1 : i64, tpu.core_type = #tpu.core_type<tc>, window_params = [{transform_indices = @transform_0, window_bounds = array<i64: 16, 128>}, {pipeline_mode = #tpu.pipeline_mode<synchronous>, transform_indices = @transform_1, window_bounds = array<i64: 4, 16, 16>}, {transform_indices = @transform_2, window_bounds = array<i64: 1, 1, 128>}, {transform_indices = @transform_3, window_bounds = array<i64: 1, 128, 384>}, {transform_indices = @transform_4, window_bounds = array<i64: 1, 128, 128>}, {transform_indices = @transform_5, window_bounds = array<i64: 1, 1, 128>}, {transform_indices = @transform_6, window_bounds = array<i64: 1, 128, 256>}, {transform_indices = @transform_7, window_bounds = array<i64: 1, 256, 128>}, {pipeline_mode = #tpu.pipeline_mode<synchronous>, transform_indices = @transform_8, window_bounds = array<i64: 1, 128>}, {transform_indices = @transform_9, window_bounds = array<i64: 1, 1, 128>}]} {
    %c0_i32 = arith.constant 0 : i32
    %0 = arith.cmpi eq, %arg1, %c0_i32 : i32
    %1 = arith.extui %0 : i1 to i32
    %c0_i32_0 = arith.constant 0 : i32
    %2 = arith.cmpi ne, %1, %c0_i32_0 : i32
    scf.if %2 {
      %c0_40 = arith.constant 0 : index
      %c0_41 = arith.constant 0 : index
      %112 = vector.load %arg2[%c0_40, %c0_41] : memref<16x128xf32, #tpu.memory_space<vmem>>, vector<16x128xf32>
      %c0_42 = arith.constant 0 : index
      %c0_43 = arith.constant 0 : index
      %113 = vector.load %arg12[%c0_42, %c0_43] : memref<16x128xf32, #tpu.memory_space<vmem>>, vector<16x128xf32>
      tpu.vector_store %arg12[%c0_42, %c0_43], %112 {strides = array<i32>} : memref<16x128xf32, #tpu.memory_space<vmem>>, vector<16x128xf32>,
    } else {
    }
    %c0 = arith.constant 0 : index
    %c0_1 = arith.constant 0 : index
    %3 = vector.load %arg12[%c0, %c0_1] : memref<16x128xf32, #tpu.memory_space<vmem>>, vector<16x128xf32>
    %c0_2 = arith.constant 0 : index
    %c0_3 = arith.constant 0 : index
    %c0_4 = arith.constant 0 : index
    %4 = vector.load %arg4[%c0_2, %c0_3, %c0_4] : memref<1x1x128xf32, #tpu.memory_space<vmem>>, vector<1x1x128xf32>
    %5 = vector.shape_cast %4 : vector<1x1x128xf32> to vector<1x128xf32>
    %6 = arith.mulf %3, %3 : vector<16x128xf32>
    %cst = arith.constant dense<0.000000e+00> : vector<16xf32>
    %7 = vector.multi_reduction <add>, %6, %cst [1] : vector<16x128xf32> to vector<16xf32>
    %8 = vector.shape_cast %7 : vector<16xf32> to vector<16x1xf32>
    %cst_5 = arith.constant 1.280000e+02 : f32
    %9 = vector.broadcast %cst_5 : f32 to vector<16x1xf32>
    %10 = arith.divf %8, %9 : vector<16x1xf32>
    %cst_6 = arith.constant 9.99999997E-7 : f32
    %11 = vector.broadcast %cst_6 : f32 to vector<16x1xf32>
    %12 = arith.addf %10, %11 : vector<16x1xf32>
    %13 = math.rsqrt %12 : vector<16x1xf32>
    %14 = vector.broadcast %13 : vector<16x1xf32> to vector<16x128xf32>
    %15 = arith.mulf %3, %14 : vector<16x128xf32>
    %16 = vector.broadcast %5 : vector<1x128xf32> to vector<16x128xf32>
    %17 = arith.mulf %15, %16 : vector<16x128xf32>
    %18 = arith.truncf %17 : vector<16x128xf32> to vector<16x128xbf16>
    %c0_7 = arith.constant 0 : index
    %c0_8 = arith.constant 0 : index
    %c0_9 = arith.constant 0 : index
    %19 = vector.load %arg5[%c0_7, %c0_8, %c0_9] : memref<1x128x384xbf16, #tpu.memory_space<vmem>>, vector<1x128x384xbf16>
    %20 = vector.shape_cast %19 : vector<1x128x384xbf16> to vector<128x384xbf16>
    %cst_10 = arith.constant dense<0.000000e+00> : vector<16x384xf32>
    %21 = tpu.matmul %18, %20, %cst_10 {dimension_numbers = #tpu.dot_dimension_numbers<[1], [0], [0], [1], [0, 0, 1, 1], [], []>} : vector<16x128xbf16>, vector<128x384xbf16>, vector<16x384xf32> -> vector<16x384xf32>
    %22 = vector.extract_strided_slice %21 {offsets = [0, 0], sizes = [16, 128], strides = [1, 1]} : vector<16x384xf32> to vector<16x128xf32>
    %23 = vector.extract_strided_slice %22 {offsets = [0, 0], sizes = [16, 32], strides = [1, 1]} : vector<16x128xf32> to vector<16x32xf32>
    %24 = vector.extract_strided_slice %22 {offsets = [0, 32], sizes = [16, 32], strides = [1, 1]} : vector<16x128xf32> to vector<16x32xf32>
    %25 = vector.extract_strided_slice %22 {offsets = [0, 64], sizes = [16, 32], strides = [1, 1]} : vector<16x128xf32> to vector<16x32xf32>
    %26 = vector.extract_strided_slice %22 {offsets = [0, 96], sizes = [16, 32], strides = [1, 1]} : vector<16x128xf32> to vector<16x32xf32>
    %27 = vector.shape_cast %23 : vector<16x32xf32> to vector<1x16x32xf32>
    %28 = vector.shape_cast %24 : vector<16x32xf32> to vector<1x16x32xf32>
    %29 = vector.shape_cast %25 : vector<16x32xf32> to vector<1x16x32xf32>
    %30 = vector.shape_cast %26 : vector<16x32xf32> to vector<1x16x32xf32>
    %31 = tpu.concatenate %27, %28, %29, %30 in 0 : vector<1x16x32xf32>, vector<1x16x32xf32>, vector<1x16x32xf32>, vector<1x16x32xf32> -> vector<4x16x32xf32>
    %32 = arith.truncf %31 : vector<4x16x32xf32> to vector<4x16x32xbf16>
    %33 = vector.extract_strided_slice %21 {offsets = [0, 128], sizes = [16, 128], strides = [1, 1]} : vector<16x384xf32> to vector<16x128xf32>
    %34 = vector.extract_strided_slice %33 {offsets = [0, 0], sizes = [16, 32], strides = [1, 1]} : vector<16x128xf32> to vector<16x32xf32>
    %35 = vector.extract_strided_slice %33 {offsets = [0, 32], sizes = [16, 32], strides = [1, 1]} : vector<16x128xf32> to vector<16x32xf32>
    %36 = vector.extract_strided_slice %33 {offsets = [0, 64], sizes = [16, 32], strides = [1, 1]} : vector<16x128xf32> to vector<16x32xf32>
    %37 = vector.extract_strided_slice %33 {offsets = [0, 96], sizes = [16, 32], strides = [1, 1]} : vector<16x128xf32> to vector<16x32xf32>
    %38 = vector.shape_cast %34 : vector<16x32xf32> to vector<1x16x32xf32>
    %39 = vector.shape_cast %35 : vector<16x32xf32> to vector<1x16x32xf32>
    %40 = vector.shape_cast %36 : vector<16x32xf32> to vector<1x16x32xf32>
    %41 = vector.shape_cast %37 : vector<16x32xf32> to vector<1x16x32xf32>
    %42 = tpu.concatenate %38, %39, %40, %41 in 0 : vector<1x16x32xf32>, vector<1x16x32xf32>, vector<1x16x32xf32>, vector<1x16x32xf32> -> vector<4x16x32xf32>
    %43 = arith.truncf %42 : vector<4x16x32xf32> to vector<4x16x32xbf16>
    %44 = vector.extract_strided_slice %21 {offsets = [0, 256], sizes = [16, 128], strides = [1, 1]} : vector<16x384xf32> to vector<16x128xf32>
    %45 = vector.extract_strided_slice %44 {offsets = [0, 0], sizes = [16, 32], strides = [1, 1]} : vector<16x128xf32> to vector<16x32xf32>
    %46 = vector.extract_strided_slice %44 {offsets = [0, 32], sizes = [16, 32], strides = [1, 1]} : vector<16x128xf32> to vector<16x32xf32>
    %47 = vector.extract_strided_slice %44 {offsets = [0, 64], sizes = [16, 32], strides = [1, 1]} : vector<16x128xf32> to vector<16x32xf32>
    %48 = vector.extract_strided_slice %44 {offsets = [0, 96], sizes = [16, 32], strides = [1, 1]} : vector<16x128xf32> to vector<16x32xf32>
    %49 = vector.shape_cast %45 : vector<16x32xf32> to vector<1x16x32xf32>
    %50 = vector.shape_cast %46 : vector<16x32xf32> to vector<1x16x32xf32>
    %51 = vector.shape_cast %47 : vector<16x32xf32> to vector<1x16x32xf32>
    %52 = vector.shape_cast %48 : vector<16x32xf32> to vector<1x16x32xf32>
    %53 = tpu.concatenate %49, %50, %51, %52 in 0 : vector<1x16x32xf32>, vector<1x16x32xf32>, vector<1x16x32xf32>, vector<1x16x32xf32> -> vector<4x16x32xf32>
    %54 = arith.truncf %53 : vector<4x16x32xf32> to vector<4x16x32xbf16>
    "tpu.trace_start"() <{level = 10 : i32, message = "hqd,hkd->hqk"}> : () -> ()
    %cst_11 = arith.constant dense<0.000000e+00> : vector<4x16x16xf32>
    %55 = tpu.matmul %32, %43, %cst_11 {dimension_numbers = #tpu.dot_dimension_numbers<[2], [2], [1], [1], [0, 0, 0, 1, 1, 1], [0], [0]>} : vector<4x16x32xbf16>, vector<4x16x32xbf16>, vector<4x16x16xf32> -> vector<4x16x16xf32>
    "tpu.trace_stop"() : () -> ()
    %c0_12 = arith.constant 0 : index
    %c0_13 = arith.constant 0 : index
    %c0_14 = arith.constant 0 : index
    %56 = vector.load %arg3[%c0_12, %c0_13, %c0_14] : memref<4x16x16xf32, #tpu.memory_space<vmem>>, vector<4x16x16xf32>
    %57 = arith.addf %55, %56 : vector<4x16x16xf32>
    %cst_15 = arith.constant dense<0xFF800000> : vector<4x16xf32>
    %58 = vector.multi_reduction <maximumf>, %57, %cst_15 [2] : vector<4x16x16xf32> to vector<4x16xf32>
    %59 = vector.shape_cast %58 : vector<4x16xf32> to vector<4x16x1xf32>
    %60 = vector.broadcast %59 : vector<4x16x1xf32> to vector<4x16x16xf32>
    %61 = arith.subf %57, %60 : vector<4x16x16xf32>
    %62 = math.exp %61 : vector<4x16x16xf32>
    %cst_16 = arith.constant dense<0.000000e+00> : vector<4x16xf32>
    %63 = vector.multi_reduction <add>, %62, %cst_16 [2] : vector<4x16x16xf32> to vector<4x16xf32>
    %64 = vector.shape_cast %63 : vector<4x16xf32> to vector<4x16x1xf32>
    %65 = vector.broadcast %64 : vector<4x16x1xf32> to vector<4x16x16xf32>
    %66 = arith.divf %62, %65 : vector<4x16x16xf32>
    %67 = arith.truncf %66 : vector<4x16x16xf32> to vector<4x16x16xbf16>
    "tpu.trace_start"() <{level = 10 : i32, message = "hqk,hkd->hqd"}> : () -> ()
    %cst_17 = arith.constant dense<0.000000e+00> : vector<4x16x32xf32>
    %68 = tpu.matmul %67, %54, %cst_17 {dimension_numbers = #tpu.dot_dimension_numbers<[2], [1], [1], [2], [0, 0, 0, 1, 1, 2], [0], [0]>} : vector<4x16x16xbf16>, vector<4x16x32xbf16>, vector<4x16x32xf32> -> vector<4x16x32xf32>
    "tpu.trace_stop"() : () -> ()
    %69 = vector.extract_strided_slice %68 {offsets = [0, 0, 0], sizes = [1, 16, 32], strides = [1, 1, 1]} : vector<4x16x32xf32> to vector<1x16x32xf32>
    %70 = vector.shape_cast %69 : vector<1x16x32xf32> to vector<16x32xf32>
    %71 = vector.extract_strided_slice %68 {offsets = [1, 0, 0], sizes = [1, 16, 32], strides = [1, 1, 1]} : vector<4x16x32xf32> to vector<1x16x32xf32>
    %72 = vector.shape_cast %71 : vector<1x16x32xf32> to vector<16x32xf32>
    %73 = vector.extract_strided_slice %68 {offsets = [2, 0, 0], sizes = [1, 16, 32], strides = [1, 1, 1]} : vector<4x16x32xf32> to vector<1x16x32xf32>
    %74 = vector.shape_cast %73 : vector<1x16x32xf32> to vector<16x32xf32>
    %75 = vector.extract_strided_slice %68 {offsets = [3, 0, 0], sizes = [1, 16, 32], strides = [1, 1, 1]} : vector<4x16x32xf32> to vector<1x16x32xf32>
    %76 = vector.shape_cast %75 : vector<1x16x32xf32> to vector<16x32xf32>
    %77 = tpu.concatenate %70, %72, %74, %76 in 1 : vector<16x32xf32>, vector<16x32xf32>, vector<16x32xf32>, vector<16x32xf32> -> vector<16x128xf32>
    %78 = arith.truncf %77 : vector<16x128xf32> to vector<16x128xbf16>
    %c0_18 = arith.constant 0 : index
    %c0_19 = arith.constant 0 : index
    %c0_20 = arith.constant 0 : index
    %79 = vector.load %arg6[%c0_18, %c0_19, %c0_20] : memref<1x128x128xbf16, #tpu.memory_space<vmem>>, vector<1x128x128xbf16>
    %80 = vector.shape_cast %79 : vector<1x128x128xbf16> to vector<128x128xbf16>
    %cst_21 = arith.constant dense<0.000000e+00> : vector<16x128xf32>
    %81 = tpu.matmul %78, %80, %cst_21 {dimension_numbers = #tpu.dot_dimension_numbers<[1], [0], [0], [1], [0, 0, 1, 1], [], []>} : vector<16x128xbf16>, vector<128x128xbf16>, vector<16x128xf32> -> vector<16x128xf32>
    %82 = arith.addf %3, %81 : vector<16x128xf32>
    %c0_22 = arith.constant 0 : index
    %c0_23 = arith.constant 0 : index
    %c0_24 = arith.constant 0 : index
    %83 = vector.load %arg7[%c0_22, %c0_23, %c0_24] : memref<1x1x128xf32, #tpu.memory_space<vmem>>, vector<1x1x128xf32>
    %84 = vector.shape_cast %83 : vector<1x1x128xf32> to vector<1x128xf32>
    %85 = arith.mulf %82, %82 : vector<16x128xf32>
    %cst_25 = arith.constant dense<0.000000e+00> : vector<16xf32>
    %86 = vector.multi_reduction <add>, %85, %cst_25 [1] : vector<16x128xf32> to vector<16xf32>
    %87 = vector.shape_cast %86 : vector<16xf32> to vector<16x1xf32>
    %cst_26 = arith.constant 1.280000e+02 : f32
    %88 = vector.broadcast %cst_26 : f32 to vector<16x1xf32>
    %89 = arith.divf %87, %88 : vector<16x1xf32>
    %cst_27 = arith.constant 9.99999997E-7 : f32
    %90 = vector.broadcast %cst_27 : f32 to vector<16x1xf32>
    %91 = arith.addf %89, %90 : vector<16x1xf32>
    %92 = math.rsqrt %91 : vector<16x1xf32>
    %93 = vector.broadcast %92 : vector<16x1xf32> to vector<16x128xf32>
    %94 = arith.mulf %82, %93 : vector<16x128xf32>
    %95 = vector.broadcast %84 : vector<1x128xf32> to vector<16x128xf32>
    %96 = arith.mulf %94, %95 : vector<16x128xf32>
    %97 = arith.truncf %96 : vector<16x128xf32> to vector<16x128xbf16>
    %c0_28 = arith.constant 0 : index
    %c0_29 = arith.constant 0 : index
    %c0_30 = arith.constant 0 : index
    %98 = vector.load %arg8[%c0_28, %c0_29, %c0_30] : memref<1x128x256xbf16, #tpu.memory_space<vmem>>, vector<1x128x256xbf16>
    %99 = vector.shape_cast %98 : vector<1x128x256xbf16> to vector<128x256xbf16>
    %cst_31 = arith.constant dense<0.000000e+00> : vector<16x256xf32>
    %100 = tpu.matmul %97, %99, %cst_31 {dimension_numbers = #tpu.dot_dimension_numbers<[1], [0], [0], [1], [0, 0, 1, 1], [], []>} : vector<16x128xbf16>, vector<128x256xbf16>, vector<16x256xf32> -> vector<16x256xf32>
    %cst_32 = arith.constant 0.000000e+00 : f32
    %101 = vector.broadcast %cst_32 : f32 to vector<16x256xf32>
    %102 = arith.maximumf %100, %101 : vector<16x256xf32>
    %103 = arith.truncf %102 : vector<16x256xf32> to vector<16x256xbf16>
    %c0_33 = arith.constant 0 : index
    %c0_34 = arith.constant 0 : index
    %c0_35 = arith.constant 0 : index
    %104 = vector.load %arg9[%c0_33, %c0_34, %c0_35] : memref<1x256x128xbf16, #tpu.memory_space<vmem>>, vector<1x256x128xbf16>
    %105 = vector.shape_cast %104 : vector<1x256x128xbf16> to vector<256x128xbf16>
    %cst_36 = arith.constant dense<0.000000e+00> : vector<16x128xf32>
    %106 = tpu.matmul %103, %105, %cst_36 {dimension_numbers = #tpu.dot_dimension_numbers<[1], [0], [0], [1], [0, 0, 1, 1], [], []>} : vector<16x256xbf16>, vector<256x128xbf16>, vector<16x128xf32> -> vector<16x128xf32>
    %107 = arith.addf %82, %106 : vector<16x128xf32>
    %c0_37 = arith.constant 0 : index
    %c0_38 = arith.constant 0 : index
    %108 = vector.load %arg12[%c0_37, %c0_38] : memref<16x128xf32, #tpu.memory_space<vmem>>, vector<16x128xf32>
    tpu.vector_store %arg12[%c0_37, %c0_38], %107 {strides = array<i32>} : memref<16x128xf32, #tpu.memory_space<vmem>>, vector<16x128xf32>,
    %c1_i32 = arith.constant 1 : i32
    %109 = arith.cmpi eq, %arg1, %c1_i32 : i32
    %110 = arith.extui %109 : i1 to i32
    %c0_i32_39 = arith.constant 0 : i32
    %111 = arith.cmpi ne, %110, %c0_i32_39 : i32
    scf.if %111 {
      %c0_40 = arith.constant 0 : index
      %c0_41 = arith.constant 0 : index
      %112 = vector.load %arg10[%c0_40, %c0_41] : memref<1x128xf32, #tpu.memory_space<vmem>>, vector<1x128xf32>
      %113 = arith.mulf %107, %107 : vector<16x128xf32>
      %cst_42 = arith.constant dense<0.000000e+00> : vector<16xf32>
      %114 = vector.multi_reduction <add>, %113, %cst_42 [1] : vector<16x128xf32> to vector<16xf32>
      %115 = vector.shape_cast %114 : vector<16xf32> to vector<16x1xf32>
      %cst_43 = arith.constant 1.280000e+02 : f32
      %116 = vector.broadcast %cst_43 : f32 to vector<16x1xf32>
      %117 = arith.divf %115, %116 : vector<16x1xf32>
      %cst_44 = arith.constant 9.99999997E-7 : f32
      %118 = vector.broadcast %cst_44 : f32 to vector<16x1xf32>
      %119 = arith.addf %117, %118 : vector<16x1xf32>
      %120 = math.rsqrt %119 : vector<16x1xf32>
      %121 = vector.broadcast %120 : vector<16x1xf32> to vector<16x128xf32>
      %122 = arith.mulf %107, %121 : vector<16x128xf32>
      %123 = vector.broadcast %112 : vector<1x128xf32> to vector<16x128xf32>
      %124 = arith.mulf %122, %123 : vector<16x128xf32>
      %cst_45 = arith.constant dense<0.000000e+00> : vector<128xf32>
      %125 = vector.multi_reduction <add>, %124, %cst_45 [0] : vector<16x128xf32> to vector<128xf32>
      %126 = vector.shape_cast %125 : vector<128xf32> to vector<1x128xf32>
      %cst_46 = arith.constant 1.600000e+01 : f32
      %127 = vector.broadcast %cst_46 : f32 to vector<1x128xf32>
      %128 = arith.divf %126, %127 : vector<1x128xf32>
      %129 = vector.shape_cast %128 : vector<1x128xf32> to vector<1x1x128xf32>
      %c0_47 = arith.constant 0 : index
      %c0_48 = arith.constant 0 : index
      %c0_49 = arith.constant 0 : index
      %130 = vector.load %arg11[%c0_47, %c0_48, %c0_49] : memref<1x1x128xf32, #tpu.memory_space<vmem>>, vector<1x1x128xf32>
      tpu.vector_store %arg11[%c0_47, %c0_48, %c0_49], %129 {strides = array<i32>} : memref<1x1x128xf32, #tpu.memory_space<vmem>>, vector<1x1x128xf32>,
    } else {
    }
    return
  }
  func.func @transform_0(%arg0: i32, %arg1: i32) -> (i32, i32) {
    %c0_i32 = arith.constant 0 : i32
    %c0_i32_0 = arith.constant 0 : i32
    return %arg0, %c0_i32 : i32, i32
  }
  func.func @transform_1(%arg0: i32, %arg1: i32) -> (i32, i32, i32) {
    %c0_i32 = arith.constant 0 : i32
    %c0_i32_0 = arith.constant 0 : i32
    %c0_i32_1 = arith.constant 0 : i32
    %c0_i32_2 = arith.constant 0 : i32
    return %c0_i32, %c0_i32_0, %c0_i32_1 : i32, i32, i32
  }
  func.func @transform_2(%arg0: i32, %arg1: i32) -> (i32, i32, i32) {
    %c0_i32 = arith.constant 0 : i32
    %c0_i32_0 = arith.constant 0 : i32
    %c0_i32_1 = arith.constant 0 : i32
    return %arg1, %c0_i32, %c0_i32_0 : i32, i32, i32
  }
  func.func @transform_3(%arg0: i32, %arg1: i32) -> (i32, i32, i32) {
    %c0_i32 = arith.constant 0 : i32
    %c0_i32_0 = arith.constant 0 : i32
    %c0_i32_1 = arith.constant 0 : i32
    return %arg1, %c0_i32, %c0_i32_0 : i32, i32, i32
  }
  func.func @transform_4(%arg0: i32, %arg1: i32) -> (i32, i32, i32) {
    %c0_i32 = arith.constant 0 : i32
    %c0_i32_0 = arith.constant 0 : i32
    %c0_i32_1 = arith.constant 0 : i32
    return %arg1, %c0_i32, %c0_i32_0 : i32, i32, i32
  }
  func.func @transform_5(%arg0: i32, %arg1: i32) -> (i32, i32, i32) {
    %c0_i32 = arith.constant 0 : i32
    %c0_i32_0 = arith.constant 0 : i32
    %c0_i32_1 = arith.constant 0 : i32
    return %arg1, %c0_i32, %c0_i32_0 : i32, i32, i32
  }
  func.func @transform_6(%arg0: i32, %arg1: i32) -> (i32, i32, i32) {
    %c0_i32 = arith.constant 0 : i32
    %c0_i32_0 = arith.constant 0 : i32
    %c0_i32_1 = arith.constant 0 : i32
    return %arg1, %c0_i32, %c0_i32_0 : i32, i32, i32
  }
  func.func @transform_7(%arg0: i32, %arg1: i32) -> (i32, i32, i32) {
    %c0_i32 = arith.constant 0 : i32
    %c0_i32_0 = arith.constant 0 : i32
    %c0_i32_1 = arith.constant 0 : i32
    return %arg1, %c0_i32, %c0_i32_0 : i32, i32, i32
  }
  func.func @transform_8(%arg0: i32, %arg1: i32) -> (i32, i32) {
    %c0_i32 = arith.constant 0 : i32
    %c0_i32_0 = arith.constant 0 : i32
    %c0_i32_1 = arith.constant 0 : i32
    return %c0_i32, %c0_i32_0 : i32, i32
  }
  func.func @transform_9(%arg0: i32, %arg1: i32) -> (i32, i32, i32) {
    %c0_i32 = arith.constant 0 : i32
    %c0_i32_0 = arith.constant 0 : i32
    %c0_i32_1 = arith.constant 0 : i32
    return %arg0, %c0_i32, %c0_i32_0 : i32, i32, i32
  }
}

</mosaic_0001>

<llo_original>
// kernel: text_encoder_forward.1
$region0: #{text_encoder_forward.1}
  #allocation0 [shape = 'u32[]', space=smem, size = 0x4, offset = 0x4, fixed_abs, tag = 'smem constant byte address 0x4 - core index']
  #allocation1 [shape = 'u32[144,128]{1,0:T(1,128)}', space=vmem, size = 0x12000, scoped, tag = 'internal scratch']
  #allocation2 [shape = 'f32[16,128]{1,0:T(8,128)}', space=vmem, size = 0x2000, scoped, tag = 'scratch operand']
  %s0 = inlined_call_operand.vmem [shape: f32[32,128], index: 0, kind: input, shape index: {}]
  %s1 = inlined_call_operand.vmem [shape: f32[4,16,16], index: 1, kind: input, shape index: {}]
  %s2 = inlined_call_operand.vmem [shape: f32[2,1,128], index: 2, kind: input, shape index: {}]
  %s3 = inlined_call_operand.vmem [shape: bf16[2,128,384], index: 3, kind: input, shape index: {}]
  %s4 = inlined_call_operand.vmem [shape: bf16[2,128,128], index: 4, kind: input, shape index: {}]
  %s5 = inlined_call_operand.vmem [shape: f32[2,1,128], index: 5, kind: input, shape index: {}]
  %s6 = inlined_call_operand.vmem [shape: bf16[2,128,256], index: 6, kind: input, shape index: {}]
  %s7 = inlined_call_operand.vmem [shape: bf16[2,256,128], index: 7, kind: input, shape index: {}]
  %s8 = inlined_call_operand.vmem [shape: f32[1,128], index: 8, kind: input, shape index: {}]
  %s9 = inlined_call_operand.hbm [shape: f32[2,1,128], index: 9, kind: output, shape index: {}]
  %s10 = sld [smem:[#allocation0]]
  $region77: #{text_encoder_forward.1} parent=0
    _
  %s12 = ssub.s32 1, %s10
  %s13 = scalar_select 0, %s12, %s10
  $region1: #{text_encoder_forward.1} parent=0
    #allocation3 [shape = 'u8[1024]{0}', space=vmem, size = 0x400, scoped, tag = 'output window, operand 0']
    #allocation4 [shape = 's32[2]{0}', space=sflag, size = 0x8, scoped, tag = 'scoped memory for text_encoder_forward.1']
    %14 = vsyncpa [#allocation4], 0
    %s15 = scalar_lea.sflag [#allocation4], 1
    %16 = vsyncpa %s15, 0
    loop: start=0, step=1, limit=6
    $region2: #{text_encoder_forward.1} parent=1 // loop_pre_header
      _
    $region3: #{text_encoder_forward.1} parent=1 // loop_header
      %s18 = sphi 0, %s22
      %p19 = scmp.ge.s32.totalorder %s18, 6
      %s25 = sphi 0, %s37
      %s26 = sphi 0, %s33
      %s27 = sphi 0, %s25
      %s28 = sphi 0, %s26
      %s29 = sphi 0, %s27
      %s30 = sphi 0, %s28
      %s40 = sphi 0, %s42
      %s43 = sphi 0, %s40
      %s44 = sphi 0, %s43
      %s60 = sphi 0, %s44
      %s64 = sphi 0, %s64
      %s66 = sphi 0, %s64
      %s67 = sphi 0, %s66
      %s81 = sphi 0, %s67
      %s87 = sphi 0, %s89
      %s90 = sphi 0, %s87
      %s91 = sphi 0, %s90
      %s107 = sphi 0, %s91
      %s113 = sphi 0, %s115
      %s116 = sphi 0, %s113
      %s117 = sphi 0, %s116
      %s133 = sphi 0, %s117
      %s139 = sphi 0, %s141
      %s142 = sphi 0, %s139
      %s143 = sphi 0, %s142
      %s159 = sphi 0, %s143
      %s165 = sphi 0, %s167
      %s168 = sphi 0, %s165
      %s169 = sphi 0, %s168
      %s185 = sphi 0, %s169
      %s191 = sphi 0, %s193
      %s194 = sphi 0, %s191
      %s195 = sphi 0, %s194
      %s211 = sphi 0, %s195
      %s217 = sphi 0, %s219
      %s220 = sphi 0, %s217
      %s221 = sphi 0, %s220
      %s237 = sphi 0, %s221
      %s241 = sphi 0, %s241
      %s243 = sphi 0, %s241
      %s244 = sphi 0, %s243
      %s258 = sphi 0, %s244
      %s264 = sphi 0, %s266
      %s267 = sphi 0, %s264
      %s268 = sphi 0, %s267
      %s284 = sphi 0, %s268
    $region4: #{text_encoder_forward.1} parent=1 // loop_header_branch
      %21 = sbr.rel (%p19) target = $region8
    $region5: #{text_encoder_forward.1} parent=1 // loop_body
      %s23 = ssub.s32 %s18, 1
      %s24 = ssub.s32 %s18, 2
      %s31 = sadd.s32 1, %s26
      %p32 = scmp.ge.s32.totalorder %s31, 2
      %s33 = scalar_select %p32, 0, %s31
      %s34 = sadd.s32 1, %s25
      %s35 = scalar_select %p32, %s34, %s25
      %p36 = scmp.ge.s32.totalorder %s35, 2
      %s37 = scalar_select %p36, 0, %s35
      %s38 = ssub.s32 %s25, %s37
      %p39 = scmp.eq.s32.totalorder %s38, 0
      %s41 = sadd.s32 %s40, 1
      %s42 = scalar_select %p39, %s40, %s41
      %p45 = pneg %p39
      %p46 = scmp.eq.s32.totalorder %s18, 3
      %p47 = por %p45, %p46
      %p48 = scmp.ne.s32.totalorder %s40, %s43
      %p49 = scmp.eq.s32.totalorder %s18, 0
      %p50 = por %p48, %p49
      %p51 = scmp.ne.s32.totalorder %s40, %s43
      %p52 = scmp.eq.s32.totalorder %s23, 3
      %p53 = por %p51, %p52
      %p54 = scmp.ne.s32.totalorder %s43, %s44
      %p55 = scmp.eq.s32.totalorder %s23, 0
      %p56 = por %p54, %p55
      %p57 = scmp.ne.s32.totalorder %s43, %s44
      %p58 = scmp.eq.s32.totalorder %s24, 3
      %p59 = por %p57, %p58
      %p61 = scmp.ne.s32.totalorder %s44, %s60
      %p62 = scmp.eq.s32.totalorder %s24, 0
      %p63 = por %p61, %p62
      %s65 = sadd.s32 %s64, 1
      %p68 = scmp.eq.s32.totalorder %s18, 3
      %p69 = scmp.ne.s32.totalorder %s64, %s66
      %p70 = scmp.eq.s32.totalorder %s18, 0
      %p71 = por %p69, %p70
      %p72 = scmp.ne.s32.totalorder %s64, %s66
      %p73 = scmp.eq.s32.totalorder %s23, 3
      %p74 = por %p72, %p73
      %p75 = scmp.ne.s32.totalorder %s66, %s67
      %p76 = scmp.eq.s32.totalorder %s23, 0
      %p77 = por %p75, %p76
      %p78 = scmp.ne.s32.totalorder %s66, %s67
      %p79 = scmp.eq.s32.totalorder %s24, 3
      %p80 = por %p78, %p79
      %p82 = scmp.ne.s32.totalorder %s67, %s81
      %p83 = scmp.eq.s32.totalorder %s24, 0
      %p84 = por %p82, %p83
      %s85 = ssub.s32 %s26, %s33
      %p86 = scmp.eq.s32.totalorder %s85, 0
      %s88 = sadd.s32 %s87, 1
      %s89 = scalar_select %p86, %s87, %s88
      %p92 = pneg %p86
      %p93 = scmp.eq.s32.totalorder %s18, 3
      %p94 = por %p92, %p93
      %p95 = scmp.ne.s32.totalorder %s87, %s90
      %p96 = scmp.eq.s32.totalorder %s18, 0
      %p97 = por %p95, %p96
      %p98 = scmp.ne.s32.totalorder %s87, %s90
      %p99 = scmp.eq.s32.totalorder %s23, 3
      %p100 = por %p98, %p99
      %p101 = scmp.ne.s32.totalorder %s90, %s91
      %p102 = scmp.eq.s32.totalorder %s23, 0
      %p103 = por %p101, %p102
      %p104 = scmp.ne.s32.totalorder %s90, %s91
      %p105 = scmp.eq.s32.totalorder %s24, 3
      %p106 = por %p104, %p105
      %p108 = scmp.ne.s32.totalorder %s91, %s107
      %p109 = scmp.eq.s32.totalorder %s24, 0
      %p110 = por %p108, %p109
      %s111 = ssub.s32 %s26, %s33
      %p112 = scmp.eq.s32.totalorder %s111, 0
      %s114 = sadd.s32 %s113, 1
      %s115 = scalar_select %p112, %s113, %s114
      %p118 = pneg %p112
      %p119 = scmp.eq.s32.totalorder %s18, 3
      %p120 = por %p118, %p119
      %p121 = scmp.ne.s32.totalorder %s113, %s116
      %p122 = scmp.eq.s32.totalorder %s18, 0
      %p123 = por %p121, %p122
      %p124 = scmp.ne.s32.totalorder %s113, %s116
      %p125 = scmp.eq.s32.totalorder %s23, 3
      %p126 = por %p124, %p125
      %p127 = scmp.ne.s32.totalorder %s116, %s117
      %p128 = scmp.eq.s32.totalorder %s23, 0
      %p129 = por %p127, %p128
      %p130 = scmp.ne.s32.totalorder %s116, %s117
      %p131 = scmp.eq.s32.totalorder %s24, 3
      %p132 = por %p130, %p131
      %p134 = scmp.ne.s32.totalorder %s117, %s133
      %p135 = scmp.eq.s32.totalorder %s24, 0
      %p136 = por %p134, %p135
      %s137 = ssub.s32 %s26, %s33
      %p138 = scmp.eq.s32.totalorder %s137, 0
      %s140 = sadd.s32 %s139, 1
      %s141 = scalar_select %p138, %s139, %s140
      %p144 = pneg %p138
      %p145 = scmp.eq.s32.totalorder %s18, 3
      %p146 = por %p144, %p145
      %p147 = scmp.ne.s32.totalorder %s139, %s142
      %p148 = scmp.eq.s32.totalorder %s18, 0
      %p149 = por %p147, %p148
      %p150 = scmp.ne.s32.totalorder %s139, %s142
      %p151 = scmp.eq.s32.totalorder %s23, 3
      %p152 = por %p150, %p151
      %p153 = scmp.ne.s32.totalorder %s142, %s143
      %p154 = scmp.eq.s32.totalorder %s23, 0
      %p155 = por %p153, %p154
      %p156 = scmp.ne.s32.totalorder %s142, %s143
      %p157 = scmp.eq.s32.totalorder %s24, 3
      %p158 = por %p156, %p157
      %p160 = scmp.ne.s32.totalorder %s143, %s159
      %p161 = scmp.eq.s32.totalorder %s24, 0
      %p162 = por %p160, %p161
      %s163 = ssub.s32 %s26, %s33
      %p164 = scmp.eq.s32.totalorder %s163, 0
      %s166 = sadd.s32 %s165, 1
      %s167 = scalar_select %p164, %s165, %s166
      %p170 = pneg %p164
      %p171 = scmp.eq.s32.totalorder %s18, 3
      %p172 = por %p170, %p171
      %p173 = scmp.ne.s32.totalorder %s165, %s168
      %p174 = scmp.eq.s32.totalorder %s18, 0
      %p175 = por %p173, %p174
      %p176 = scmp.ne.s32.totalorder %s165, %s168
      %p177 = scmp.eq.s32.totalorder %s23, 3
      %p178 = por %p176, %p177
      %p179 = scmp.ne.s32.totalorder %s168, %s169
      %p180 = scmp.eq.s32.totalorder %s23, 0
      %p181 = por %p179, %p180
      %p182 = scmp.ne.s32.totalorder %s168, %s169
      %p183 = scmp.eq.s32.totalorder %s24, 3
      %p184 = por %p182, %p183
      %p186 = scmp.ne.s32.totalorder %s169, %s185
      %p187 = scmp.eq.s32.totalorder %s24, 0
      %p188 = por %p186, %p187
      %s189 = ssub.s32 %s26, %s33
      %p190 = scmp.eq.s32.totalorder %s189, 0
      %s192 = sadd.s32 %s191, 1
      %s193 = scalar_select %p190, %s191, %s192
      %p196 = pneg %p190
      %p197 = scmp.eq.s32.totalorder %s18, 3
      %p198 = por %p196, %p197
      %p199 = scmp.ne.s32.totalorder %s191, %s194
      %p200 = scmp.eq.s32.totalorder %s18, 0
      %p201 = por %p199, %p200
      %p202 = scmp.ne.s32.totalorder %s191, %s194
      %p203 = scmp.eq.s32.totalorder %s23, 3
      %p204 = por %p202, %p203
      %p205 = scmp.ne.s32.totalorder %s194, %s195
      %p206 = scmp.eq.s32.totalorder %s23, 0
      %p207 = por %p205, %p206
      %p208 = scmp.ne.s32.totalorder %s194, %s195
      %p209 = scmp.eq.s32.totalorder %s24, 3
      %p210 = por %p208, %p209
      %p212 = scmp.ne.s32.totalorder %s195, %s211
      %p213 = scmp.eq.s32.totalorder %s24, 0
      %p214 = por %p212, %p213
      %s215 = ssub.s32 %s26, %s33
      %p216 = scmp.eq.s32.totalorder %s215, 0
      %s218 = sadd.s32 %s217, 1
      %s219 = scalar_select %p216, %s217, %s218
      %p222 = pneg %p216
      %p223 = scmp.eq.s32.totalorder %s18, 3
      %p224 = por %p222, %p223
      %p225 = scmp.ne.s32.totalorder %s217, %s220
      %p226 = scmp.eq.s32.totalorder %s18, 0
      %p227 = por %p225, %p226
      %p228 = scmp.ne.s32.totalorder %s217, %s220
      %p229 = scmp.eq.s32.totalorder %s23, 3
      %p230 = por %p228, %p229
      %p231 = scmp.ne.s32.totalorder %s220, %s221
      %p232 = scmp.eq.s32.totalorder %s23, 0
      %p233 = por %p231, %p232
      %p234 = scmp.ne.s32.totalorder %s220, %s221
      %p235 = scmp.eq.s32.totalorder %s24, 3
      %p236 = por %p234, %p235
      %p238 = scmp.ne.s32.totalorder %s221, %s237
      %p239 = scmp.eq.s32.totalorder %s24, 0
      %p240 = por %p238, %p239
      %s242 = sadd.s32 %s241, 1
      %p245 = scmp.eq.s32.totalorder %s18, 3
      %p246 = scmp.ne.s32.totalorder %s241, %s243
      %p247 = scmp.eq.s32.totalorder %s18, 0
      %p248 = por %p246, %p247
      %p249 = scmp.ne.s32.totalorder %s241, %s243
      %p250 = scmp.eq.s32.totalorder %s23, 3
      %p251 = por %p249, %p250
      %p252 = scmp.ne.s32.totalorder %s243, %s244
      %p253 = scmp.eq.s32.totalorder %s23, 0
      %p254 = por %p252, %p253
      %p255 = scmp.ne.s32.totalorder %s243, %s244
      %p256 = scmp.eq.s32.totalorder %s24, 3
      %p257 = por %p255, %p256
      %p259 = scmp.ne.s32.totalorder %s244, %s258
      %p260 = scmp.eq.s32.totalorder %s24, 0
      %p261 = por %p259, %p260
      %s262 = ssub.s32 %s25, %s37
      %p263 = scmp.eq.s32.totalorder %s262, 0
      %s265 = sadd.s32 %s264, 1
      %s266 = scalar_select %p263, %s264, %s265
      %p269 = pneg %p263
      %p270 = scmp.eq.s32.totalorder %s18, 3
      %p271 = por %p269, %p270
      %p272 = scmp.ne.s32.totalorder %s264, %s267
      %p273 = scmp.eq.s32.totalorder %s18, 0
      %p274 = por %p272, %p273
      %p275 = scmp.ne.s32.totalorder %s264, %s267
      %p276 = scmp.eq.s32.totalorder %s23, 3
      %p277 = por %p275, %p276
      %p278 = scmp.ne.s32.totalorder %s267, %s268
      %p279 = scmp.eq.s32.totalorder %s23, 0
      %p280 = por %p278, %p279
      %p281 = scmp.ne.s32.totalorder %s267, %s268
      %p282 = scmp.eq.s32.totalorder %s24, 3
      %p283 = por %p281, %p282
      %p285 = scmp.ne.s32.totalorder %s268, %s284
      %p286 = scmp.eq.s32.totalorder %s24, 0
      %p287 = por %p285, %p286
      %p288 = scmp.le.s32.totalorder 1, %s18
      %p289 = scmp.lt.s32.totalorder %s18, 5
      %p290 = pnand %p288, %p289
      %p291 = pneg %p290
      // Predicated region
      $region9: #{text_encoder_forward.1} parent=5 // pred_check
        _
      $region10: #{text_encoder_forward.1} parent=5 // pred_check_branch
        %293 = sbr.rel (%p290) target = $region12
      $region11: #{text_encoder_forward.1} parent=5 // pred_region
        %s294 = ssub.s32 %s18, 1
        // Predicated region
        $region13: #{text_encoder_forward.1} parent=11 // pred_check
          %p295 = pneg %p77
        $region14: #{text_encoder_forward.1} parent=11 // pred_check_branch
          %297 = sbr.rel (%p295) target = $region16
        $region15: #{text_encoder_forward.1} parent=11 // pred_region
          _
        $region16: #{text_encoder_forward.1} parent=11 // pred_fallthru
          _
        // Predicated region
        $region17: #{text_encoder_forward.1} parent=11 // pred_check
          %p298 = pneg %p254
        $region18: #{text_encoder_forward.1} parent=11 // pred_check_branch
          %300 = sbr.rel (%p298) target = $region20
        $region19: #{text_encoder_forward.1} parent=11 // pred_region
          _
        $region20: #{text_encoder_forward.1} parent=11 // pred_fallthru
          _
      $region12: #{text_encoder_forward.1} parent=5 // pred_fallthru
        _
      %p301 = scmp.lt.s32.totalorder %s18, 4
      // Predicated region
      $region21: #{text_encoder_forward.1} parent=5 // pred_check
        %p302 = pneg %p301
      $region22: #{text_encoder_forward.1} parent=5 // pred_check_branch
        %304 = sbr.rel (%p302) target = $region24
      $region23: #{text_encoder_forward.1} parent=5 // pred_region
        // Predicated region
        $region25: #{text_encoder_forward.1} parent=23 // pred_check
          %p305 = pneg %p50
        $region26: #{text_encoder_forward.1} parent=23 // pred_check_branch
          %307 = sbr.rel (%p305) target = $region28
        $region27: #{text_encoder_forward.1} parent=23 // pred_region
          %s308 = smul.u32 2, %s25
          %p309 = scmp.lt.s32.totalorder %s308, 3
          %s310 = scalar_select %p309, %s308, 3
          %s311 = smul.addr %s310, 8
          %s312 = scalar_lea.vmem %s0, %s311
          %s313 = smul.u32 2, %s25
        $region28: #{text_encoder_forward.1} parent=23 // pred_fallthru
          _
        // Predicated region
        $region29: #{text_encoder_forward.1} parent=23 // pred_check
          %p314 = pneg %p97
        $region30: #{text_encoder_forward.1} parent=23 // pred_check_branch
          %316 = sbr.rel (%p314) target = $region32
        $region31: #{text_encoder_forward.1} parent=23 // pred_region
          %p317 = scmp.lt.s32.totalorder %s26, 1
          %s318 = scalar_select %p317, %s26, 1
          %s319 = scalar_lea.vmem %s2, %s318
        $region32: #{text_encoder_forward.1} parent=23 // pred_fallthru
          _
        // Predicated region
        $region33: #{text_encoder_forward.1} parent=23 // pred_check
          %p320 = pneg %p123
        $region34: #{text_encoder_forward.1} parent=23 // pred_check_branch
          %322 = sbr.rel (%p320) target = $region36
        $region35: #{text_encoder_forward.1} parent=23 // pred_region
          %p323 = scmp.lt.s32.totalorder %s26, 1
          %s324 = scalar_select %p323, %s26, 1
          %s325 = smul.addr %s324, 48
          %s326 = smul.addr %s325, 4
          %s327 = scalar_lea.vmem %s3, %s326
        $region36: #{text_encoder_forward.1} parent=23 // pred_fallthru
          _
        // Predicated region
        $region37: #{text_encoder_forward.1} parent=23 // pred_check
          %p328 = pneg %p149
        $region38: #{text_encoder_forward.1} parent=23 // pred_check_branch
          %330 = sbr.rel (%p328) target = $region40
        $region39: #{text_encoder_forward.1} parent=23 // pred_region
          %p331 = scmp.lt.s32.totalorder %s26, 1
          %s332 = scalar_select %p331, %s26, 1
          %s333 = smul.addr %s332, 16
          %s334 = smul.addr %s333, 4
          %s335 = scalar_lea.vmem %s4, %s334
        $region40: #{text_encoder_forward.1} parent=23 // pred_fallthru
          _
        // Predicated region
        $region41: #{text_encoder_forward.1} parent=23 // pred_check
          %p336 = pneg %p175
        $region42: #{text_encoder_forward.1} parent=23 // pred_check_branch
          %338 = sbr.rel (%p336) target = $region44
        $region43: #{text_encoder_forward.1} parent=23 // pred_region
          %p339 = scmp.lt.s32.totalorder %s26, 1
          %s340 = scalar_select %p339, %s26, 1
          %s341 = scalar_lea.vmem %s5, %s340
        $region44: #{text_encoder_forward.1} parent=23 // pred_fallthru
          _
        // Predicated region
        $region45: #{text_encoder_forward.1} parent=23 // pred_check
          %p342 = pneg %p201
        $region46: #{text_encoder_forward.1} parent=23 // pred_check_branch
          %344 = sbr.rel (%p342) target = $region48
        $region47: #{text_encoder_forward.1} parent=23 // pred_region
          %p345 = scmp.lt.s32.totalorder %s26, 1
          %s346 = scalar_select %p345, %s26, 1
          %s347 = smul.addr %s346, 32
          %s348 = smul.addr %s347, 4
          %s349 = scalar_lea.vmem %s6, %s348
        $region48: #{text_encoder_forward.1} parent=23 // pred_fallthru
          _
        // Predicated region
        $region49: #{text_encoder_forward.1} parent=23 // pred_check
          %p350 = pneg %p227
        $region50: #{text_encoder_forward.1} parent=23 // pred_check_branch
          %352 = sbr.rel (%p350) target = $region52
        $region51: #{text_encoder_forward.1} parent=23 // pred_region
          %p353 = scmp.lt.s32.totalorder %s26, 1
          %s354 = scalar_select %p353, %s26, 1
          %s355 = smul.addr %s354, 32
          %s356 = smul.addr %s355, 4
          %s357 = scalar_lea.vmem %s7, %s356
        $region52: #{text_encoder_forward.1} parent=23 // pred_fallthru
          _
      $region24: #{text_encoder_forward.1} parent=5 // pred_fallthru
        _
      %p358 = scmp.le.s32.totalorder 1, %s18
      %p359 = scmp.lt.s32.totalorder %s18, 5
      %p360 = pnand %p358, %p359
      %p361 = pneg %p360
      // Predicated region
      $region53: #{text_encoder_forward.1} parent=5 // pred_check
        _
      $region54: #{text_encoder_forward.1} parent=5 // pred_check_branch
        %363 = sbr.rel (%p360) target = $region56
      $region55: #{text_encoder_forward.1} parent=5 // pred_region
        %s364 = ssub.s32 %s18, 1
        %s365 = smul.u32 2, %s27
        %p366 = scmp.lt.s32.totalorder %s365, 3
        %s367 = scalar_select %p366, %s365, 3
        %s368 = smul.addr %s367, 8
        %s369 = scalar_lea.vmem %s0, %s368
        %p370 = pneg %p56
        %p371 = pneg %p53
        %p372 = pneg %p77
        %p373 = pneg %p74
        %p374 = scmp.lt.s32.totalorder %s28, 1
        %s375 = scalar_select %p374, %s28, 1
        %s376 = scalar_lea.vmem %s2, %s375
        %p377 = pneg %p103
        %p378 = pneg %p100
        %p379 = scmp.lt.s32.totalorder %s28, 1
        %s380 = scalar_select %p379, %s28, 1
        %s381 = smul.addr %s380, 48
        %s382 = smul.addr %s381, 4
        %s383 = scalar_lea.vmem %s3, %s382
        %p384 = pneg %p129
        %p385 = pneg %p126
        %p386 = scmp.lt.s32.totalorder %s28, 1
        %s387 = scalar_select %p386, %s28, 1
        %s388 = smul.addr %s387, 16
        %s389 = smul.addr %s388, 4
        %s390 = scalar_lea.vmem %s4, %s389
        %p391 = pneg %p155
        %p392 = pneg %p152
        %p393 = scmp.lt.s32.totalorder %s28, 1
        %s394 = scalar_select %p393, %s28, 1
        %s395 = scalar_lea.vmem %s5, %s394
        %p396 = pneg %p181
        %p397 = pneg %p178
        %p398 = scmp.lt.s32.totalorder %s28, 1
        %s399 = scalar_select %p398, %s28, 1
        %s400 = smul.addr %s399, 32
        %s401 = smul.addr %s400, 4
        %s402 = scalar_lea.vmem %s6, %s401
        %p403 = pneg %p207
        %p404 = pneg %p204
        %p405 = scmp.lt.s32.totalorder %s28, 1
        %s406 = scalar_select %p405, %s28, 1
        %s407 = smul.addr %s406, 32
        %s408 = smul.addr %s407, 4
        %s409 = scalar_lea.vmem %s7, %s408
        %p410 = pneg %p233
        %p411 = pneg %p230
        %p412 = pneg %p254
        %p413 = pneg %p251
        %p414 = pneg %p280
        %p415 = pneg %p277
        %s416 = sand.u32 %s267, 1
        %s417 = scalar_lea.sflag [#allocation4], %s416
        %s418 = sand.u32 %s267, 1
        %s419 = scalar_lea.vmem [#allocation3], %s418
        %s420 = smul.u32 2, %s27
        %p421 = scmp.lt.s32.totalorder %s420, 3
        %s422 = scalar_select %p421, %s420, 3
        %s423 = smul.addr %s422, 8
        %s424 = scalar_lea.vmem %s0, %s423
        %s425 = smul.u32 2, %s27
        %p426 = scmp.lt.s32.totalorder %s28, 1
        %s427 = scalar_select %p426, %s28, 1
        %s428 = scalar_lea.vmem %s2, %s427
        %p429 = scmp.lt.s32.totalorder %s28, 1
        %s430 = scalar_select %p429, %s28, 1
        %s431 = smul.addr %s430, 48
        %s432 = smul.addr %s431, 4
        %s433 = scalar_lea.vmem %s3, %s432
        %p434 = scmp.lt.s32.totalorder %s28, 1
        %s435 = scalar_select %p434, %s28, 1
        %s436 = smul.addr %s435, 16
        %s437 = smul.addr %s436, 4
        %s438 = scalar_lea.vmem %s4, %s437
        %p439 = scmp.lt.s32.totalorder %s28, 1
        %s440 = scalar_select %p439, %s28, 1
        %s441 = scalar_lea.vmem %s5, %s440
        %p442 = scmp.lt.s32.totalorder %s28, 1
        %s443 = scalar_select %p442, %s28, 1
        %s444 = smul.addr %s443, 32
        %s445 = smul.addr %s444, 4
        %s446 = scalar_lea.vmem %s6, %s445
        %p447 = scmp.lt.s32.totalorder %s28, 1
        %s448 = scalar_select %p447, %s28, 1
        %s449 = smul.addr %s448, 32
        %s450 = smul.addr %s449, 4
        %s451 = scalar_lea.vmem %s7, %s450
        %p453 = scmp.eq.s32.totalorder %s28, 0
        // Predicated region
        $region57: #{text_encoder_forward.1} parent=55 // pred_check
          %p454 = pneg %p453
        $region58: #{text_encoder_forward.1} parent=55 // pred_check_branch
          %456 = sbr.rel (%p454) target = $region60
        $region59: #{text_encoder_forward.1} parent=55 // pred_region
          %v457 = vld [vmem:[%s424] sm:$0xff]
          %v458 = vld [vmem:[%s424 + $0x8] sm:$0xff]
          %459 = vst [vmem:[#allocation2] sm:$0xff] %v457
          %460 = vst [vmem:[#allocation2 + $0x8] sm:$0xff] %v458
        $region60: #{text_encoder_forward.1} parent=55 // pred_fallthru
          _
        %v461 = vld [vmem:[#allocation2] sm:$0xff]
        %v462 = vld [vmem:[#allocation2 + $0x8] sm:$0xff]
        %v463 = vld [vmem:[%s428] sm:$0x1]
        %v464 = vmul.f32 %v461, %v461
        %v465 = vmul.f32 %v462, %v462
        %466 = vadd.xlane.f32.xlu0 %v464
        %v467 = vpop.xlane.xlu0 %466
        %468 = vadd.xlane.f32.xlu0 %v465
        %v469 = vpop.xlane.xlu0 %468
        %v470 = vrcp.pop 128.0
        %v471 = vmul.f32 %v467, %v470
        %v472 = vmul.f32 %v469, %v470
        %v473 = vadd.f32 %v471, 1e-06
        %v474 = vadd.f32 %v472, 1e-06
        %v475 = vrsqrt.pop %v473
        %v476 = vrsqrt.pop %v474
        %v477 = vmul.f32 %v461, %v475
        %v478 = vmul.f32 %v462, %v476
        %v480 = vlaneseq
        %v481 = vshrl.u32 %v480, 7
        %v482 = vsub.s32 0, %v481
        %v483 = vrot.slane %v463, %v482
        %v485 = vmul.f32 %v477, %v483
        %v486 = vmul.f32 %v478, %v483
        %v487 = vpack.c.bf16 %v486, %v485
        %v488 = vld [vmem:[%s433] sm:$0xff]
        %v489 = vld [vmem:[%s433 + $0x8] sm:$0xf]
        %v490 = vld [vmem:[%s433 + $0xc] sm:$0xff]
        %v491 = vld [vmem:[%s433 + $0x14] sm:$0xf]
        %v492 = vld [vmem:[%s433 + $0x18] sm:$0xff]
        %v493 = vld [vmem:[%s433 + $0x20] sm:$0xf]
        %v494 = vld [vmem:[%s433 + $0x24] sm:$0xff]
        %v495 = vld [vmem:[%s433 + $0x2c] sm:$0xf]
        %v496 = vld [vmem:[%s433 + $0x30] sm:$0xff]
        %v497 = vld [vmem:[%s433 + $0x38] sm:$0xf]
        %v498 = vld [vmem:[%s433 + $0x3c] sm:$0xff]
        %v499 = vld [vmem:[%s433 + $0x44] sm:$0xf]
        %v500 = vld [vmem:[%s433 + $0x48] sm:$0xff]
        %v501 = vld [vmem:[%s433 + $0x50] sm:$0xf]
        %v502 = vld [vmem:[%s433 + $0x54] sm:$0xff]
        %v503 = vld [vmem:[%s433 + $0x5c] sm:$0xf]
        %v504 = vld [vmem:[%s433 + $0x60] sm:$0xff]
        %v505 = vld [vmem:[%s433 + $0x68] sm:$0xf]
        %v506 = vld [vmem:[%s433 + $0x6c] sm:$0xff]
        %v507 = vld [vmem:[%s433 + $0x74] sm:$0xf]
        %v508 = vld [vmem:[%s433 + $0x78] sm:$0xff]
        %v509 = vld [vmem:[%s433 + $0x80] sm:$0xf]
        %v510 = vld [vmem:[%s433 + $0x84] sm:$0xff]
        %v511 = vld [vmem:[%s433 + $0x8c] sm:$0xf]
        %v512 = vld [vmem:[%s433 + $0x90] sm:$0xff]
        %v513 = vld [vmem:[%s433 + $0x98] sm:$0xf]
        %v514 = vld [vmem:[%s433 + $0x9c] sm:$0xff]
        %v515 = vld [vmem:[%s433 + $0xa4] sm:$0xf]
        %v516 = vld [vmem:[%s433 + $0xa8] sm:$0xff]
        %v517 = vld [vmem:[%s433 + $0xb0] sm:$0xf]
        %v518 = vld [vmem:[%s433 + $0xb4] sm:$0xff]
        %v519 = vld [vmem:[%s433 + $0xbc] sm:$0xf]
        %v552 = vunpack.c.l.b16 %v488
        %v553 = vunpack.c.h.b16 %v488
        %v554 = vunpack.c.l.b16 %v489
        %v555 = vunpack.c.l.b16 %v490
        %v556 = vunpack.c.h.b16 %v490
        %v557 = vunpack.c.l.b16 %v491
        %v558 = vunpack.c.l.b16 %v492
        %v559 = vunpack.c.h.b16 %v492
        %v560 = vunpack.c.l.b16 %v493
        %v561 = vunpack.c.l.b16 %v494
        %v562 = vunpack.c.h.b16 %v494
        %v563 = vunpack.c.l.b16 %v495
        %v564 = vunpack.c.l.b16 %v496
        %v565 = vunpack.c.h.b16 %v496
        %v566 = vunpack.c.l.b16 %v497
        %v567 = vunpack.c.l.b16 %v498
        %v568 = vunpack.c.h.b16 %v498
        %v569 = vunpack.c.l.b16 %v499
        %v570 = vunpack.c.l.b16 %v500
        %v571 = vunpack.c.h.b16 %v500
        %v572 = vunpack.c.l.b16 %v501
        %v573 = vunpack.c.l.b16 %v502
        %v574 = vunpack.c.h.b16 %v502
        %v575 = vunpack.c.l.b16 %v503
        %v576 = vunpack.c.l.b16 %v504
        %v577 = vunpack.c.h.b16 %v504
        %v578 = vunpack.c.l.b16 %v505
        %v579 = vunpack.c.l.b16 %v506
        %v580 = vunpack.c.h.b16 %v506
        %v581 = vunpack.c.l.b16 %v507
        %v582 = vunpack.c.l.b16 %v508
        %v583 = vunpack.c.h.b16 %v508
        %v584 = vunpack.c.l.b16 %v509
        %v585 = vunpack.c.l.b16 %v510
        %v586 = vunpack.c.h.b16 %v510
        %v587 = vunpack.c.l.b16 %v511
        %v588 = vunpack.c.l.b16 %v512
        %v589 = vunpack.c.h.b16 %v512
        %v590 = vunpack.c.l.b16 %v513
        %v591 = vunpack.c.l.b16 %v514
        %v592 = vunpack.c.h.b16 %v514
        %v593 = vunpack.c.l.b16 %v515
        %v594 = vunpack.c.l.b16 %v516
        %v595 = vunpack.c.h.b16 %v516
        %v596 = vunpack.c.l.b16 %v517
        %v597 = vunpack.c.l.b16 %v518
        %v598 = vunpack.c.h.b16 %v518
        %v599 = vunpack.c.l.b16 %v519
        %v600 = vpack.c.b16 %v555, %v552
        %v601 = vpack.c.b16 %v556, %v553
        %v602 = vpack.c.b16 %v557, %v554
        %v603 = vpack.c.b16 %v561, %v558
        %v604 = vpack.c.b16 %v562, %v559
        %v605 = vpack.c.b16 %v563, %v560
        %v606 = vpack.c.b16 %v567, %v564
        %v607 = vpack.c.b16 %v568, %v565
        %v608 = vpack.c.b16 %v569, %v566
        %v609 = vpack.c.b16 %v573, %v570
        %v610 = vpack.c.b16 %v574, %v571
        %v611 = vpack.c.b16 %v575, %v572
        %v612 = vpack.c.b16 %v579, %v576
        %v613 = vpack.c.b16 %v580, %v577
        %v614 = vpack.c.b16 %v581, %v578
        %v615 = vpack.c.b16 %v585, %v582
        %v616 = vpack.c.b16 %v586, %v583
        %v617 = vpack.c.b16 %v587, %v584
        %v618 = vpack.c.b16 %v591, %v588
        %v619 = vpack.c.b16 %v592, %v589
        %v620 = vpack.c.b16 %v593, %v590
        %v621 = vpack.c.b16 %v597, %v594
        %v622 = vpack.c.b16 %v598, %v595
        %v623 = vpack.c.b16 %v599, %v596
        %648 = vmatprep.subr.bf16.mxu0 %v622
        %649 = vmatpush1.bf16.msra.mxu0 %v621
        %650 = vmatprep.subr.bf16.mxu0 %v619
        %651 = vmatpush1.bf16.msra.mxu0 %v618
        %652 = vmatprep.subr.bf16.mxu0 %v616
        %653 = vmatpush1.bf16.msra.mxu0 %v615
        %654 = vmatprep.subr.bf16.mxu0 %v613
        %655 = vmatpush1.bf16.msra.mxu0 %v612
        %656 = vmatprep.subr.bf16.mxu0 %v610
        %657 = vmatpush1.bf16.msra.mxu0 %v609
        %658 = vmatprep.subr.bf16.mxu0 %v607
        %659 = vmatpush1.bf16.msra.mxu0 %v606
        %660 = vmatprep.subr.bf16.mxu0 %v604
        %661 = vmatpush1.bf16.msra.mxu0 %v603
        %662 = vmatprep.subr.bf16.mxu0 %v601
        %663 = vmatpush1.bf16.msra.mxu0 %v600
        %664 = vmatprep.subr.bf16.mxu0 0
        %665 = vmatpush2.bf16.msra.mxu0 0
        %666 = vmatprep.subr.bf16.mxu0 0
        %667 = vmatpush2.bf16.msra.mxu0 0
        %668 = vmatprep.subr.bf16.mxu0 0
        %669 = vmatpush2.bf16.msra.mxu0 0
        %670 = vmatprep.subr.bf16.mxu0 0
        %671 = vmatpush2.bf16.msra.mxu0 0
        %672 = vmatprep.subr.bf16.mxu0 0
        %673 = vmatpush2.bf16.msra.mxu0 0
        %674 = vmatprep.subr.bf16.mxu0 0
        %675 = vmatpush2.bf16.msra.mxu0 0
        %676 = vmatprep.subr.bf16.mxu0 0
        %677 = vmatpush2.bf16.msra.mxu0 0
        %678 = vmatprep.subr.bf16.mxu0 0
        %679 = vmatpush2.bf16.msra.mxu0 0
        %680 = vmatprep.mubr.bf16.mxu0 0
        %681 = vmatmul.mubr.bf16.gmra.mxu0 %v487
        %v682 = vpop.f32.mrf.mxu0
        %v683 = vadd.f32 0.0, %v682
        %v684 = vpop.f32.mrf.mxu0
        %v685 = vadd.f32 0.0, %v684
        %v686 = vpop.f32.mrf.mxu0
        %v687 = vadd.f32 0.0, %v686
        %v688 = vpop.f32.mrf.mxu0
        %v689 = vadd.f32 0.0, %v688
        %690 = vdwg.mxu0
        %691 = vmatprep.subr.bf16.mxu0 0
        %692 = vmatpush1.bf16.msra.mxu0 %v623
        %693 = vmatprep.subr.bf16.mxu0 0
        %694 = vmatpush1.bf16.msra.mxu0 %v620
        %695 = vmatprep.subr.bf16.mxu0 0
        %696 = vmatpush1.bf16.msra.mxu0 %v617
        %697 = vmatprep.subr.bf16.mxu0 0
        %698 = vmatpush1.bf16.msra.mxu0 %v614
        %699 = vmatprep.subr.bf16.mxu0 0
        %700 = vmatpush1.bf16.msra.mxu0 %v611
        %701 = vmatprep.subr.bf16.mxu0 0
        %702 = vmatpush1.bf16.msra.mxu0 %v608
        %703 = vmatprep.subr.bf16.mxu0 0
        %704 = vmatpush1.bf16.msra.mxu0 %v605
        %705 = vmatprep.subr.bf16.mxu0 0
        %706 = vmatpush1.bf16.msra.mxu0 %v602
        %707 = vmatprep.subr.bf16.mxu0 0
        %708 = vmatpush2.bf16.msra.mxu0 0
        %709 = vmatprep.subr.bf16.mxu0 0
        %710 = vmatpush2.bf16.msra.mxu0 0
        %711 = vmatprep.subr.bf16.mxu0 0
        %712 = vmatpush2.bf16.msra.mxu0 0
        %713 = vmatprep.subr.bf16.mxu0 0
        %714 = vmatpush2.bf16.msra.mxu0 0
        %715 = vmatprep.subr.bf16.mxu0 0
        %716 = vmatpush2.bf16.msra.mxu0 0
        %717 = vmatprep.subr.bf16.mxu0 0
        %718 = vmatpush2.bf16.msra.mxu0 0
        %719 = vmatprep.subr.bf16.mxu0 0
        %720 = vmatpush2.bf16.msra.mxu0 0
        %721 = vmatprep.subr.bf16.mxu0 0
        %722 = vmatpush2.bf16.msra.mxu0 0
        %723 = vmatprep.mubr.bf16.mxu0 0
        %724 = vmatmul.mubr.bf16.gmra.mxu0 %v487
        %v725 = vpop.f32.mrf.mxu0
        %v726 = vadd.f32 0.0, %v725
        %v727 = vpop.f32.mrf.mxu0
        %v728 = vpop.f32.mrf.mxu0
        %v729 = vadd.f32 0.0, %v728
        %v730 = vpop.f32.mrf.mxu0
        %731 = vdwg.mxu0
        %734 = vrot.lane.b32.xlu0 %v683, 96
        %v735 = vpop.permute.xlu0 %734
        %736 = vrot.lane.b32.xlu0 %v687, 96
        %v737 = vpop.permute.xlu0 %736
        %740 = vrot.lane.b32.xlu0 %v683, 64
        %v741 = vpop.permute.xlu0 %740
        %742 = vrot.lane.b32.xlu0 %v687, 64
        %v743 = vpop.permute.xlu0 %742
        %746 = vrot.lane.b32.xlu0 %v683, 32
        %v747 = vpop.permute.xlu0 %746
        %748 = vrot.lane.b32.xlu0 %v687, 32
        %v749 = vpop.permute.xlu0 %748
        %v752 = vpack.c.bf16 %v687, %v683
        %v753 = vpack.c.bf16 %v737, %v735
        %v754 = vpack.c.bf16 %v743, %v741
        %v755 = vpack.c.bf16 %v749, %v747
        %758 = vrot.lane.b32.xlu0 %v685, 96
        %v759 = vpop.permute.xlu0 %758
        %760 = vrot.lane.b32.xlu0 %v689, 96
        %v761 = vpop.permute.xlu0 %760
        %764 = vrot.lane.b32.xlu0 %v685, 64
        %v765 = vpop.permute.xlu0 %764
        %766 = vrot.lane.b32.xlu0 %v689, 64
        %v767 = vpop.permute.xlu0 %766
        %770 = vrot.lane.b32.xlu0 %v685, 32
        %v771 = vpop.permute.xlu0 %770
        %772 = vrot.lane.b32.xlu0 %v689, 32
        %v773 = vpop.permute.xlu0 %772
        %v776 = vpack.c.bf16 %v689, %v685
        %v777 = vpack.c.bf16 %v761, %v759
        %v778 = vpack.c.bf16 %v767, %v765
        %v779 = vpack.c.bf16 %v773, %v771
        %782 = vrot.lane.b32.xlu0 %v726, 96
        %v783 = vpop.permute.xlu0 %782
        %784 = vrot.lane.b32.xlu0 %v729, 96
        %v785 = vpop.permute.xlu0 %784
        %788 = vrot.lane.b32.xlu0 %v726, 64
        %v789 = vpop.permute.xlu0 %788
        %790 = vrot.lane.b32.xlu0 %v729, 64
        %v791 = vpop.permute.xlu0 %790
        %794 = vrot.lane.b32.xlu0 %v726, 32
        %v795 = vpop.permute.xlu0 %794
        %796 = vrot.lane.b32.xlu0 %v729, 32
        %v797 = vpop.permute.xlu0 %796
        %v800 = vpack.c.bf16 %v729, %v726
        %v801 = vpack.c.bf16 %v785, %v783
        %v802 = vpack.c.bf16 %v791, %v789
        %v803 = vpack.c.bf16 %v797, %v795
        %v804 = vld [vmem:[%s1] sm:$0xff]
        %v805 = vld [vmem:[%s1 + $0x8] sm:$0xff]
        %v806 = vld [vmem:[%s1 + $0x10] sm:$0xff]
        %v807 = vld [vmem:[%s1 + $0x18] sm:$0xff]
        %v808 = vld [vmem:[%s1 + $0x20] sm:$0xff]
        %v809 = vld [vmem:[%s1 + $0x28] sm:$0xff]
        %v810 = vld [vmem:[%s1 + $0x30] sm:$0xff]
        %v811 = vld [vmem:[%s1 + $0x38] sm:$0xff]
        %vm812 = vcmask 261120
        %v814 = vsel %vm812, %v752, 0
        %v817 = vsel %vm812, %v776, 0
        %819 = vmatprep.subr.bf16.mxu0 0
        %820 = vmatpush1.bf16.xpose.msra.mxu0 0
        %821 = vmatprep.subr.bf16.mxu0 0
        %822 = vmatpush1.bf16.xpose.msra.mxu0 0
        %823 = vmatprep.subr.bf16.mxu0 0
        %824 = vmatpush1.bf16.xpose.msra.mxu0 0
        %825 = vmatprep.subr.bf16.mxu0 0
        %826 = vmatpush1.bf16.xpose.msra.mxu0 0
        %827 = vmatprep.subr.bf16.mxu0 0
        %828 = vmatpush1.bf16.xpose.msra.mxu0 0
        %829 = vmatprep.subr.bf16.mxu0 0
        %830 = vmatpush1.bf16.xpose.msra.mxu0 0
        %831 = vmatprep.subr.bf16.mxu0 0
        %832 = vmatpush1.bf16.xpose.msra.mxu0 0
        %833 = vmatprep.subr.bf16.mxu0 0
        %834 = vmatpush1.bf16.xpose.msra.mxu0 %v817
        %835 = vmatprep.subr.bf16.mxu0 0
        %836 = vmatpush2.bf16.xpose.msra.mxu0 0
        %837 = vmatprep.subr.bf16.mxu0 0
        %838 = vmatpush2.bf16.xpose.msra.mxu0 0
        %839 = vmatprep.subr.bf16.mxu0 0
        %840 = vmatpush2.bf16.xpose.msra.mxu0 0
        %841 = vmatprep.subr.bf16.mxu0 0
        %842 = vmatpush2.bf16.xpose.msra.mxu0 0
        %843 = vmatprep.subr.bf16.mxu0 0
        %844 = vmatpush2.bf16.xpose.msra.mxu0 0
        %845 = vmatprep.subr.bf16.mxu0 0
        %846 = vmatpush2.bf16.xpose.msra.mxu0 0
        %847 = vmatprep.subr.bf16.mxu0 0
        %848 = vmatpush2.bf16.xpose.msra.mxu0 0
        %849 = vmatprep.subr.bf16.mxu0 0
        %850 = vmatpush2.bf16.xpose.msra.mxu0 0
        %851 = vmatprep.mubr.bf16.mxu0 0
        %852 = vmatmul.mubr.bf16.gmra.mxu0 %v814
        %v853 = vpop.f32.mrf.mxu0
        %v854 = vadd.f32 %v804, %v853
        %v855 = vpop.f32.mrf.mxu0
        %v856 = vpop.f32.mrf.mxu0
        %v857 = vadd.f32 %v805, %v856
        %v858 = vpop.f32.mrf.mxu0
        %859 = vdwg.mxu0
        %v861 = vsel %vm812, %v753, 0
        %v864 = vsel %vm812, %v777, 0
        %866 = vmatprep.subr.bf16.mxu0 0
        %867 = vmatpush1.bf16.xpose.msra.mxu0 0
        %868 = vmatprep.subr.bf16.mxu0 0
        %869 = vmatpush1.bf16.xpose.msra.mxu0 0
        %870 = vmatprep.subr.bf16.mxu0 0
        %871 = vmatpush1.bf16.xpose.msra.mxu0 0
        %872 = vmatprep.subr.bf16.mxu0 0
        %873 = vmatpush1.bf16.xpose.msra.mxu0 0
        %874 = vmatprep.subr.bf16.mxu0 0
        %875 = vmatpush1.bf16.xpose.msra.mxu0 0
        %876 = vmatprep.subr.bf16.mxu0 0
        %877 = vmatpush1.bf16.xpose.msra.mxu0 0
        %878 = vmatprep.subr.bf16.mxu0 0
        %879 = vmatpush1.bf16.xpose.msra.mxu0 0
        %880 = vmatprep.subr.bf16.mxu0 0
        %881 = vmatpush1.bf16.xpose.msra.mxu0 %v864
        %882 = vmatprep.subr.bf16.mxu0 0
        %883 = vmatpush2.bf16.xpose.msra.mxu0 0
        %884 = vmatprep.subr.bf16.mxu0 0
        %885 = vmatpush2.bf16.xpose.msra.mxu0 0
        %886 = vmatprep.subr.bf16.mxu0 0
        %887 = vmatpush2.bf16.xpose.msra.mxu0 0
        %888 = vmatprep.subr.bf16.mxu0 0
        %889 = vmatpush2.bf16.xpose.msra.mxu0 0
        %890 = vmatprep.subr.bf16.mxu0 0
        %891 = vmatpush2.bf16.xpose.msra.mxu0 0
        %892 = vmatprep.subr.bf16.mxu0 0
        %893 = vmatpush2.bf16.xpose.msra.mxu0 0
        %894 = vmatprep.subr.bf16.mxu0 0
        %895 = vmatpush2.bf16.xpose.msra.mxu0 0
        %896 = vmatprep.subr.bf16.mxu0 0
        %897 = vmatpush2.bf16.xpose.msra.mxu0 0
        %898 = vmatprep.mubr.bf16.mxu0 0
        %899 = vmatmul.mubr.bf16.gmra.mxu0 %v861
        %v900 = vpop.f32.mrf.mxu0
        %v901 = vadd.f32 %v806, %v900
        %v902 = vpop.f32.mrf.mxu0
        %v903 = vpop.f32.mrf.mxu0
        %v904 = vadd.f32 %v807, %v903
        %v905 = vpop.f32.mrf.mxu0
        %906 = vdwg.mxu0
        %v908 = vsel %vm812, %v754, 0
        %v911 = vsel %vm812, %v778, 0
        %913 = vmatprep.subr.bf16.mxu0 0
        %914 = vmatpush1.bf16.xpose.msra.mxu0 0
        %915 = vmatprep.subr.bf16.mxu0 0
        %916 = vmatpush1.bf16.xpose.msra.mxu0 0
        %917 = vmatprep.subr.bf16.mxu0 0
        %918 = vmatpush1.bf16.xpose.msra.mxu0 0
        %919 = vmatprep.subr.bf16.mxu0 0
        %920 = vmatpush1.bf16.xpose.msra.mxu0 0
        %921 = vmatprep.subr.bf16.mxu0 0
        %922 = vmatpush1.bf16.xpose.msra.mxu0 0
        %923 = vmatprep.subr.bf16.mxu0 0
        %924 = vmatpush1.bf16.xpose.msra.mxu0 0
        %925 = vmatprep.subr.bf16.mxu0 0
        %926 = vmatpush1.bf16.xpose.msra.mxu0 0
        %927 = vmatprep.subr.bf16.mxu0 0
        %928 = vmatpush1.bf16.xpose.msra.mxu0 %v911
        %929 = vmatprep.subr.bf16.mxu0 0
        %930 = vmatpush2.bf16.xpose.msra.mxu0 0
        %931 = vmatprep.subr.bf16.mxu0 0
        %932 = vmatpush2.bf16.xpose.msra.mxu0 0
        %933 = vmatprep.subr.bf16.mxu0 0
        %934 = vmatpush2.bf16.xpose.msra.mxu0 0
        %935 = vmatprep.subr.bf16.mxu0 0
        %936 = vmatpush2.bf16.xpose.msra.mxu0 0
        %937 = vmatprep.subr.bf16.mxu0 0
        %938 = vmatpush2.bf16.xpose.msra.mxu0 0
        %939 = vmatprep.subr.bf16.mxu0 0
        %940 = vmatpush2.bf16.xpose.msra.mxu0 0
        %941 = vmatprep.subr.bf16.mxu0 0
        %942 = vmatpush2.bf16.xpose.msra.mxu0 0
        %943 = vmatprep.subr.bf16.mxu0 0
        %944 = vmatpush2.bf16.xpose.msra.mxu0 0
        %945 = vmatprep.mubr.bf16.mxu0 0
        %946 = vmatmul.mubr.bf16.gmra.mxu0 %v908
        %v947 = vpop.f32.mrf.mxu0
        %v948 = vadd.f32 %v808, %v947
        %v949 = vpop.f32.mrf.mxu0
        %v950 = vpop.f32.mrf.mxu0
        %v951 = vadd.f32 %v809, %v950
        %v952 = vpop.f32.mrf.mxu0
        %953 = vdwg.mxu0
        %v955 = vsel %vm812, %v755, 0
        %v958 = vsel %vm812, %v779, 0
        %960 = vmatprep.subr.bf16.mxu0 0
        %961 = vmatpush1.bf16.xpose.msra.mxu0 0
        %962 = vmatprep.subr.bf16.mxu0 0
        %963 = vmatpush1.bf16.xpose.msra.mxu0 0
        %964 = vmatprep.subr.bf16.mxu0 0
        %965 = vmatpush1.bf16.xpose.msra.mxu0 0
        %966 = vmatprep.subr.bf16.mxu0 0
        %967 = vmatpush1.bf16.xpose.msra.mxu0 0
        %968 = vmatprep.subr.bf16.mxu0 0
        %969 = vmatpush1.bf16.xpose.msra.mxu0 0
        %970 = vmatprep.subr.bf16.mxu0 0
        %971 = vmatpush1.bf16.xpose.msra.mxu0 0
        %972 = vmatprep.subr.bf16.mxu0 0
        %973 = vmatpush1.bf16.xpose.msra.mxu0 0
        %974 = vmatprep.subr.bf16.mxu0 0
        %975 = vmatpush1.bf16.xpose.msra.mxu0 %v958
        %976 = vmatprep.subr.bf16.mxu0 0
        %977 = vmatpush2.bf16.xpose.msra.mxu0 0
        %978 = vmatprep.subr.bf16.mxu0 0
        %979 = vmatpush2.bf16.xpose.msra.mxu0 0
        %980 = vmatprep.subr.bf16.mxu0 0
        %981 = vmatpush2.bf16.xpose.msra.mxu0 0
        %982 = vmatprep.subr.bf16.mxu0 0
        %983 = vmatpush2.bf16.xpose.msra.mxu0 0
        %984 = vmatprep.subr.bf16.mxu0 0
        %985 = vmatpush2.bf16.xpose.msra.mxu0 0
        %986 = vmatprep.subr.bf16.mxu0 0
        %987 = vmatpush2.bf16.xpose.msra.mxu0 0
        %988 = vmatprep.subr.bf16.mxu0 0
        %989 = vmatpush2.bf16.xpose.msra.mxu0 0
        %990 = vmatprep.subr.bf16.mxu0 0
        %991 = vmatpush2.bf16.xpose.msra.mxu0 0
        %992 = vmatprep.mubr.bf16.mxu0 0
        %993 = vmatmul.mubr.bf16.gmra.mxu0 %v955
        %v994 = vpop.f32.mrf.mxu0
        %v995 = vadd.f32 %v810, %v994
        %v996 = vpop.f32.mrf.mxu0
        %v997 = vpop.f32.mrf.mxu0
        %v998 = vadd.f32 %v811, %v997
        %v999 = vpop.f32.mrf.mxu0
        %1000 = vdwg.mxu0
        %vm1001 = vcmask 130048
        %v1002 = vsel %vm1001, %v854, -inf
        %1003 = vmax.xlane.f32.xlu0 %v1002
        %v1004 = vpop.xlane.xlu0 %1003
        %v1005 = vsel %vm1001, %v857, -inf
        %1006 = vmax.xlane.f32.xlu0 %v1005
        %v1007 = vpop.xlane.xlu0 %1006
        %v1008 = vsel %vm1001, %v901, -inf
        %1009 = vmax.xlane.f32.xlu0 %v1008
        %v1010 = vpop.xlane.xlu0 %1009
        %v1011 = vsel %vm1001, %v904, -inf
        %1012 = vmax.xlane.f32.xlu0 %v1011
        %v1013 = vpop.xlane.xlu0 %1012
        %v1014 = vsel %vm1001, %v948, -inf
        %1015 = vmax.xlane.f32.xlu0 %v1014
        %v1016 = vpop.xlane.xlu0 %1015
        %v1017 = vsel %vm1001, %v951, -inf
        %1018 = vmax.xlane.f32.xlu0 %v1017
        %v1019 = vpop.xlane.xlu0 %1018
        %v1020 = vsel %vm1001, %v995, -inf
        %1021 = vmax.xlane.f32.xlu0 %v1020
        %v1022 = vpop.xlane.xlu0 %1021
        %v1023 = vsel %vm1001, %v998, -inf
        %1024 = vmax.xlane.f32.xlu0 %v1023
        %v1025 = vpop.xlane.xlu0 %1024
        %v1026 = vsub.f32 %v854, %v1004
        %v1027 = vsub.f32 %v857, %v1007
        %v1028 = vsub.f32 %v901, %v1010
        %v1029 = vsub.f32 %v904, %v1013
        %v1030 = vsub.f32 %v948, %v1016
        %v1031 = vsub.f32 %v951, %v1019
        %v1032 = vsub.f32 %v995, %v1022
        %v1033 = vsub.f32 %v998, %v1025
        %v1034 = vmul.f32 %v1026, 1.442695
        %v1035 = vpow.pop %v1034
        %v1036 = vmul.f32 %v1027, 1.442695
        %v1037 = vpow.pop %v1036
        %v1038 = vmul.f32 %v1028, 1.442695
        %v1039 = vpow.pop %v1038
        %v1040 = vmul.f32 %v1029, 1.442695
        %v1041 = vpow.pop %v1040
        %v1042 = vmul.f32 %v1030, 1.442695
        %v1043 = vpow.pop %v1042
        %v1044 = vmul.f32 %v1031, 1.442695
        %v1045 = vpow.pop %v1044
        %v1046 = vmul.f32 %v1032, 1.442695
        %v1047 = vpow.pop %v1046
        %v1048 = vmul.f32 %v1033, 1.442695
        %v1049 = vpow.pop %v1048
        %v1050 = vsel %vm1001, %v1035, 0.0
        %1051 = vadd.xlane.f32.xlu0 %v1050
        %v1052 = vpop.xlane.xlu0 %1051
        %v1053 = vsel %vm1001, %v1037, 0.0
        %1054 = vadd.xlane.f32.xlu0 %v1053
        %v1055 = vpop.xlane.xlu0 %1054
        %v1056 = vsel %vm1001, %v1039, 0.0
        %1057 = vadd.xlane.f32.xlu0 %v1056
        %v1058 = vpop.xlane.xlu0 %1057
        %v1059 = vsel %vm1001, %v1041, 0.0
        %1060 = vadd.xlane.f32.xlu0 %v1059
        %v1061 = vpop.xlane.xlu0 %1060
        %v1062 = vsel %vm1001, %v1043, 0.0
        %1063 = vadd.xlane.f32.xlu0 %v1062
        %v1064 = vpop.xlane.xlu0 %1063
        %v1065 = vsel %vm1001, %v1045, 0.0
        %1066 = vadd.xlane.f32.xlu0 %v1065
        %v1067 = vpop.xlane.xlu0 %1066
        %v1068 = vsel %vm1001, %v1047, 0.0
        %1069 = vadd.xlane.f32.xlu0 %v1068
        %v1070 = vpop.xlane.xlu0 %1069
        %v1071 = vsel %vm1001, %v1049, 0.0
        %1072 = vadd.xlane.f32.xlu0 %v1071
        %v1073 = vpop.xlane.xlu0 %1072
        %v1074 = vrcp.pop %v1052
        %v1075 = vmul.f32 %v1035, %v1074
        %v1076 = vrcp.pop %v1055
        %v1077 = vmul.f32 %v1037, %v1076
        %v1078 = vrcp.pop %v1058
        %v1079 = vmul.f32 %v1039, %v1078
        %v1080 = vrcp.pop %v1061
        %v1081 = vmul.f32 %v1041, %v1080
        %v1082 = vrcp.pop %v1064
        %v1083 = vmul.f32 %v1043, %v1082
        %v1084 = vrcp.pop %v1067
        %v1085 = vmul.f32 %v1045, %v1084
        %v1086 = vrcp.pop %v1070
        %v1087 = vmul.f32 %v1047, %v1086
        %v1088 = vrcp.pop %v1073
        %v1089 = vmul.f32 %v1049, %v1088
        %v1090 = vpack.c.bf16 %v1077, %v1075
        %v1091 = vpack.c.bf16 %v1081, %v1079
        %v1092 = vpack.c.bf16 %v1085, %v1083
        %v1093 = vpack.c.bf16 %v1089, %v1087
        %v1095 = vsel %vm1001, %v1090, 0
        %1097 = vmatprep.subr.bf16.mxu0 0
        %1098 = vmatpush1.bf16.msra.mxu0 0
        %1099 = vmatprep.subr.bf16.mxu0 0
        %1100 = vmatpush1.bf16.msra.mxu0 0
        %1101 = vmatprep.subr.bf16.mxu0 0
        %1102 = vmatpush1.bf16.msra.mxu0 0
        %1103 = vmatprep.subr.bf16.mxu0 0
        %1104 = vmatpush1.bf16.msra.mxu0 0
        %1105 = vmatprep.subr.bf16.mxu0 0
        %1106 = vmatpush1.bf16.msra.mxu0 0
        %1107 = vmatprep.subr.bf16.mxu0 0
        %1108 = vmatpush1.bf16.msra.mxu0 0
        %1109 = vmatprep.subr.bf16.mxu0 0
        %1110 = vmatpush1.bf16.msra.mxu0 0
        %1111 = vmatprep.subr.bf16.mxu0 0
        %1112 = vmatpush1.bf16.msra.mxu0 %v800
        %1113 = vmatprep.subr.bf16.mxu0 0
        %1114 = vmatpush2.bf16.msra.mxu0 0
        %1115 = vmatprep.subr.bf16.mxu0 0
        %1116 = vmatpush2.bf16.msra.mxu0 0
        %1117 = vmatprep.subr.bf16.mxu0 0
        %1118 = vmatpush2.bf16.msra.mxu0 0
        %1119 = vmatprep.subr.bf16.mxu0 0
        %1120 = vmatpush2.bf16.msra.mxu0 0
        %1121 = vmatprep.subr.bf16.mxu0 0
        %1122 = vmatpush2.bf16.msra.mxu0 0
        %1123 = vmatprep.subr.bf16.mxu0 0
        %1124 = vmatpush2.bf16.msra.mxu0 0
        %1125 = vmatprep.subr.bf16.mxu0 0
        %1126 = vmatpush2.bf16.msra.mxu0 0
        %1127 = vmatprep.subr.bf16.mxu0 0
        %1128 = vmatpush2.bf16.msra.mxu0 0
        %1129 = vmatprep.mubr.bf16.mxu0 0
        %1130 = vmatmul.mubr.bf16.gmra.mxu0 %v1095
        %v1131 = vpop.f32.mrf.mxu0
        %v1132 = vadd.f32 0.0, %v1131
        %v1133 = vpop.f32.mrf.mxu0
        %v1134 = vpop.f32.mrf.mxu0
        %v1135 = vadd.f32 0.0, %v1134
        %v1136 = vpop.f32.mrf.mxu0
        %1137 = vdwg.mxu0
        %v1139 = vsel %vm1001, %v1091, 0
        %1141 = vmatprep.subr.bf16.mxu0 0
        %1142 = vmatpush1.bf16.msra.mxu0 0
        %1143 = vmatprep.subr.bf16.mxu0 0
        %1144 = vmatpush1.bf16.msra.mxu0 0
        %1145 = vmatprep.subr.bf16.mxu0 0
        %1146 = vmatpush1.bf16.msra.mxu0 0
        %1147 = vmatprep.subr.bf16.mxu0 0
        %1148 = vmatpush1.bf16.msra.mxu0 0
        %1149 = vmatprep.subr.bf16.mxu0 0
        %1150 = vmatpush1.bf16.msra.mxu0 0
        %1151 = vmatprep.subr.bf16.mxu0 0
        %1152 = vmatpush1.bf16.msra.mxu0 0
        %1153 = vmatprep.subr.bf16.mxu0 0
        %1154 = vmatpush1.bf16.msra.mxu0 0
        %1155 = vmatprep.subr.bf16.mxu0 0
        %1156 = vmatpush1.bf16.msra.mxu0 %v801
        %1157 = vmatprep.subr.bf16.mxu0 0
        %1158 = vmatpush2.bf16.msra.mxu0 0
        %1159 = vmatprep.subr.bf16.mxu0 0
        %1160 = vmatpush2.bf16.msra.mxu0 0
        %1161 = vmatprep.subr.bf16.mxu0 0
        %1162 = vmatpush2.bf16.msra.mxu0 0
        %1163 = vmatprep.subr.bf16.mxu0 0
        %1164 = vmatpush2.bf16.msra.mxu0 0
        %1165 = vmatprep.subr.bf16.mxu0 0
        %1166 = vmatpush2.bf16.msra.mxu0 0
        %1167 = vmatprep.subr.bf16.mxu0 0
        %1168 = vmatpush2.bf16.msra.mxu0 0
        %1169 = vmatprep.subr.bf16.mxu0 0
        %1170 = vmatpush2.bf16.msra.mxu0 0
        %1171 = vmatprep.subr.bf16.mxu0 0
        %1172 = vmatpush2.bf16.msra.mxu0 0
        %1173 = vmatprep.mubr.bf16.mxu0 0
        %1174 = vmatmul.mubr.bf16.gmra.mxu0 %v1139
        %v1175 = vpop.f32.mrf.mxu0
        %v1176 = vadd.f32 0.0, %v1175
        %v1177 = vpop.f32.mrf.mxu0
        %v1178 = vpop.f32.mrf.mxu0
        %v1179 = vadd.f32 0.0, %v1178
        %v1180 = vpop.f32.mrf.mxu0
        %1181 = vdwg.mxu0
        %v1183 = vsel %vm1001, %v1092, 0
        %1185 = vmatprep.subr.bf16.mxu0 0
        %1186 = vmatpush1.bf16.msra.mxu0 0
        %1187 = vmatprep.subr.bf16.mxu0 0
        %1188 = vmatpush1.bf16.msra.mxu0 0
        %1189 = vmatprep.subr.bf16.mxu0 0
        %1190 = vmatpush1.bf16.msra.mxu0 0
        %1191 = vmatprep.subr.bf16.mxu0 0
        %1192 = vmatpush1.bf16.msra.mxu0 0
        %1193 = vmatprep.subr.bf16.mxu0 0
        %1194 = vmatpush1.bf16.msra.mxu0 0
        %1195 = vmatprep.subr.bf16.mxu0 0
        %1196 = vmatpush1.bf16.msra.mxu0 0
        %1197 = vmatprep.subr.bf16.mxu0 0
        %1198 = vmatpush1.bf16.msra.mxu0 0
        %1199 = vmatprep.subr.bf16.mxu0 0
        %1200 = vmatpush1.bf16.msra.mxu0 %v802
        %1201 = vmatprep.subr.bf16.mxu0 0
        %1202 = vmatpush2.bf16.msra.mxu0 0
        %1203 = vmatprep.subr.bf16.mxu0 0
        %1204 = vmatpush2.bf16.msra.mxu0 0
        %1205 = vmatprep.subr.bf16.mxu0 0
        %1206 = vmatpush2.bf16.msra.mxu0 0
        %1207 = vmatprep.subr.bf16.mxu0 0
        %1208 = vmatpush2.bf16.msra.mxu0 0
        %1209 = vmatprep.subr.bf16.mxu0 0
        %1210 = vmatpush2.bf16.msra.mxu0 0
        %1211 = vmatprep.subr.bf16.mxu0 0
        %1212 = vmatpush2.bf16.msra.mxu0 0
        %1213 = vmatprep.subr.bf16.mxu0 0
        %1214 = vmatpush2.bf16.msra.mxu0 0
        %1215 = vmatprep.subr.bf16.mxu0 0
        %1216 = vmatpush2.bf16.msra.mxu0 0
        %1217 = vmatprep.mubr.bf16.mxu0 0
        %1218 = vmatmul.mubr.bf16.gmra.mxu0 %v1183
        %v1219 = vpop.f32.mrf.mxu0
        %v1220 = vadd.f32 0.0, %v1219
        %v1221 = vpop.f32.mrf.mxu0
        %v1222 = vpop.f32.mrf.mxu0
        %v1223 = vadd.f32 0.0, %v1222
        %v1224 = vpop.f32.mrf.mxu0
        %1225 = vdwg.mxu0
        %v1227 = vsel %vm1001, %v1093, 0
        %1229 = vmatprep.subr.bf16.mxu0 0
        %1230 = vmatpush1.bf16.msra.mxu0 0
        %1231 = vmatprep.subr.bf16.mxu0 0
        %1232 = vmatpush1.bf16.msra.mxu0 0
        %1233 = vmatprep.subr.bf16.mxu0 0
        %1234 = vmatpush1.bf16.msra.mxu0 0
        %1235 = vmatprep.subr.bf16.mxu0 0
        %1236 = vmatpush1.bf16.msra.mxu0 0
        %1237 = vmatprep.subr.bf16.mxu0 0
        %1238 = vmatpush1.bf16.msra.mxu0 0
        %1239 = vmatprep.subr.bf16.mxu0 0
        %1240 = vmatpush1.bf16.msra.mxu0 0
        %1241 = vmatprep.subr.bf16.mxu0 0
        %1242 = vmatpush1.bf16.msra.mxu0 0
        %1243 = vmatprep.subr.bf16.mxu0 0
        %1244 = vmatpush1.bf16.msra.mxu0 %v803
        %1245 = vmatprep.subr.bf16.mxu0 0
        %1246 = vmatpush2.bf16.msra.mxu0 0
        %1247 = vmatprep.subr.bf16.mxu0 0
        %1248 = vmatpush2.bf16.msra.mxu0 0
        %1249 = vmatprep.subr.bf16.mxu0 0
        %1250 = vmatpush2.bf16.msra.mxu0 0
        %1251 = vmatprep.subr.bf16.mxu0 0
        %1252 = vmatpush2.bf16.msra.mxu0 0
        %1253 = vmatprep.subr.bf16.mxu0 0
        %1254 = vmatpush2.bf16.msra.mxu0 0
        %1255 = vmatprep.subr.bf16.mxu0 0
        %1256 = vmatpush2.bf16.msra.mxu0 0
        %1257 = vmatprep.subr.bf16.mxu0 0
        %1258 = vmatpush2.bf16.msra.mxu0 0
        %1259 = vmatprep.subr.bf16.mxu0 0
        %1260 = vmatpush2.bf16.msra.mxu0 0
        %1261 = vmatprep.mubr.bf16.mxu0 0
        %1262 = vmatmul.mubr.bf16.gmra.mxu0 %v1227
        %v1263 = vpop.f32.mrf.mxu0
        %v1264 = vadd.f32 0.0, %v1263
        %v1265 = vpop.f32.mrf.mxu0
        %v1266 = vpop.f32.mrf.mxu0
        %v1267 = vadd.f32 0.0, %v1266
        %v1268 = vpop.f32.mrf.mxu0
        %1269 = vdwg.mxu0
        %1272 = vrot.lane.b32.xlu0 %v1176, 32
        %v1273 = vpop.permute.xlu0 %1272
        %1274 = vrot.lane.b32.xlu0 %v1179, 32
        %v1275 = vpop.permute.xlu0 %1274
        %1280 = vrot.lane.b32.xlu0 %v1220, 64
        %v1281 = vpop.permute.xlu0 %1280
        %1282 = vrot.lane.b32.xlu0 %v1223, 64
        %v1283 = vpop.permute.xlu0 %1282
        %1288 = vrot.lane.b32.xlu0 %v1264, 96
        %v1289 = vpop.permute.xlu0 %1288
        %1290 = vrot.lane.b32.xlu0 %v1267, 96
        %v1291 = vpop.permute.xlu0 %1290
        %v1294 = vsel %vm812, %v1132, %v1273
        %v1295 = vsel %vm812, %v1135, %v1275
        %vm1296 = vcmask 523264
        %v1297 = vsel %vm1296, %v1294, %v1281
        %v1298 = vsel %vm1296, %v1295, %v1283
        %vm1299 = vcmask 785408
        %v1300 = vsel %vm1299, %v1297, %v1289
        %v1301 = vsel %vm1299, %v1298, %v1291
        %v1302 = vpack.c.bf16 %v1301, %v1300
        %v1303 = vld [vmem:[%s438] sm:$0xf]
        %v1304 = vld [vmem:[%s438 + $0x4] sm:$0xf]
        %v1305 = vld [vmem:[%s438 + $0x8] sm:$0xf]
        %v1306 = vld [vmem:[%s438 + $0xc] sm:$0xf]
        %v1307 = vld [vmem:[%s438 + $0x10] sm:$0xf]
        %v1308 = vld [vmem:[%s438 + $0x14] sm:$0xf]
        %v1309 = vld [vmem:[%s438 + $0x18] sm:$0xf]
        %v1310 = vld [vmem:[%s438 + $0x1c] sm:$0xf]
        %v1311 = vld [vmem:[%s438 + $0x20] sm:$0xf]
        %v1312 = vld [vmem:[%s438 + $0x24] sm:$0xf]
        %v1313 = vld [vmem:[%s438 + $0x28] sm:$0xf]
        %v1314 = vld [vmem:[%s438 + $0x2c] sm:$0xf]
        %v1315 = vld [vmem:[%s438 + $0x30] sm:$0xf]
        %v1316 = vld [vmem:[%s438 + $0x34] sm:$0xf]
        %v1317 = vld [vmem:[%s438 + $0x38] sm:$0xf]
        %v1318 = vld [vmem:[%s438 + $0x3c] sm:$0xf]
        %v1335 = vunpack.c.l.b16 %v1303
        %v1336 = vunpack.c.l.b16 %v1304
        %v1337 = vunpack.c.l.b16 %v1305
        %v1338 = vunpack.c.l.b16 %v1306
        %v1339 = vunpack.c.l.b16 %v1307
        %v1340 = vunpack.c.l.b16 %v1308
        %v1341 = vunpack.c.l.b16 %v1309
        %v1342 = vunpack.c.l.b16 %v1310
        %v1343 = vunpack.c.l.b16 %v1311
        %v1344 = vunpack.c.l.b16 %v1312
        %v1345 = vunpack.c.l.b16 %v1313
        %v1346 = vunpack.c.l.b16 %v1314
        %v1347 = vunpack.c.l.b16 %v1315
        %v1348 = vunpack.c.l.b16 %v1316
        %v1349 = vunpack.c.l.b16 %v1317
        %v1350 = vunpack.c.l.b16 %v1318
        %v1351 = vpack.c.b16 %v1336, %v1335
        %v1352 = vpack.c.b16 %v1338, %v1337
        %v1353 = vpack.c.b16 %v1340, %v1339
        %v1354 = vpack.c.b16 %v1342, %v1341
        %v1355 = vpack.c.b16 %v1344, %v1343
        %v1356 = vpack.c.b16 %v1346, %v1345
        %v1357 = vpack.c.b16 %v1348, %v1347
        %v1358 = vpack.c.b16 %v1350, %v1349
        %1367 = vmatprep.subr.bf16.mxu0 0
        %1368 = vmatpush1.bf16.msra.mxu0 %v1358
        %1369 = vmatprep.subr.bf16.mxu0 0
        %1370 = vmatpush1.bf16.msra.mxu0 %v1357
        %1371 = vmatprep.subr.bf16.mxu0 0
        %1372 = vmatpush1.bf16.msra.mxu0 %v1356
        %1373 = vmatprep.subr.bf16.mxu0 0
        %1374 = vmatpush1.bf16.msra.mxu0 %v1355
        %1375 = vmatprep.subr.bf16.mxu0 0
        %1376 = vmatpush1.bf16.msra.mxu0 %v1354
        %1377 = vmatprep.subr.bf16.mxu0 0
        %1378 = vmatpush1.bf16.msra.mxu0 %v1353
        %1379 = vmatprep.subr.bf16.mxu0 0
        %1380 = vmatpush1.bf16.msra.mxu0 %v1352
        %1381 = vmatprep.subr.bf16.mxu0 0
        %1382 = vmatpush1.bf16.msra.mxu0 %v1351
        %1383 = vmatprep.subr.bf16.mxu0 0
        %1384 = vmatpush2.bf16.msra.mxu0 0
        %1385 = vmatprep.subr.bf16.mxu0 0
        %1386 = vmatpush2.bf16.msra.mxu0 0
        %1387 = vmatprep.subr.bf16.mxu0 0
        %1388 = vmatpush2.bf16.msra.mxu0 0
        %1389 = vmatprep.subr.bf16.mxu0 0
        %1390 = vmatpush2.bf16.msra.mxu0 0
        %1391 = vmatprep.subr.bf16.mxu0 0
        %1392 = vmatpush2.bf16.msra.mxu0 0
        %1393 = vmatprep.subr.bf16.mxu0 0
        %1394 = vmatpush2.bf16.msra.mxu0 0
        %1395 = vmatprep.subr.bf16.mxu0 0
        %1396 = vmatpush2.bf16.msra.mxu0 0
        %1397 = vmatprep.subr.bf16.mxu0 0
        %1398 = vmatpush2.bf16.msra.mxu0 0
        %1399 = vmatprep.mubr.bf16.mxu0 0
        %1400 = vmatmul.mubr.bf16.gmra.mxu0 %v1302
        %v1401 = vpop.f32.mrf.mxu0
        %v1402 = vadd.f32 0.0, %v1401
        %v1403 = vpop.f32.mrf.mxu0
        %v1404 = vpop.f32.mrf.mxu0
        %v1405 = vadd.f32 0.0, %v1404
        %v1406 = vpop.f32.mrf.mxu0
        %1407 = vdwg.mxu0
        %v1408 = vadd.f32 %v461, %v1402
        %v1409 = vadd.f32 %v462, %v1405
        %v1410 = vld [vmem:[%s441] sm:$0x1]
        %v1411 = vmul.f32 %v1408, %v1408
        %v1412 = vmul.f32 %v1409, %v1409
        %1413 = vadd.xlane.f32.xlu0 %v1411
        %v1414 = vpop.xlane.xlu0 %1413
        %1415 = vadd.xlane.f32.xlu0 %v1412
        %v1416 = vpop.xlane.xlu0 %1415
        %v1417 = vmul.f32 %v1414, %v470
        %v1418 = vmul.f32 %v1416, %v470
        %v1419 = vadd.f32 %v1417, 1e-06
        %v1420 = vadd.f32 %v1418, 1e-06
        %v1421 = vrsqrt.pop %v1419
        %v1422 = vrsqrt.pop %v1420
        %v1423 = vmul.f32 %v1408, %v1421
        %v1424 = vmul.f32 %v1409, %v1422
        %v1426 = vlaneseq
        %v1427 = vshrl.u32 %v1426, 7
        %v1428 = vsub.s32 0, %v1427
        %v1429 = vrot.slane %v1410, %v1428
        %v1431 = vmul.f32 %v1423, %v1429
        %v1432 = vmul.f32 %v1424, %v1429
        %v1433 = vpack.c.bf16 %v1432, %v1431
        %v1434 = vld [vmem:[%s446] sm:$0xff]
        %v1435 = vld [vmem:[%s446 + $0x8] sm:$0xff]
        %v1436 = vld [vmem:[%s446 + $0x10] sm:$0xff]
        %v1437 = vld [vmem:[%s446 + $0x18] sm:$0xff]
        %v1438 = vld [vmem:[%s446 + $0x20] sm:$0xff]
        %v1439 = vld [vmem:[%s446 + $0x28] sm:$0xff]
        %v1440 = vld [vmem:[%s446 + $0x30] sm:$0xff]
        %v1441 = vld [vmem:[%s446 + $0x38] sm:$0xff]
        %v1442 = vld [vmem:[%s446 + $0x40] sm:$0xff]
        %v1443 = vld [vmem:[%s446 + $0x48] sm:$0xff]
        %v1444 = vld [vmem:[%s446 + $0x50] sm:$0xff]
        %v1445 = vld [vmem:[%s446 + $0x58] sm:$0xff]
        %v1446 = vld [vmem:[%s446 + $0x60] sm:$0xff]
        %v1447 = vld [vmem:[%s446 + $0x68] sm:$0xff]
        %v1448 = vld [vmem:[%s446 + $0x70] sm:$0xff]
        %v1449 = vld [vmem:[%s446 + $0x78] sm:$0xff]
        %v1466 = vunpack.c.l.b16 %v1434
        %v1467 = vunpack.c.h.b16 %v1434
        %v1468 = vunpack.c.l.b16 %v1435
        %v1469 = vunpack.c.h.b16 %v1435
        %v1470 = vunpack.c.l.b16 %v1436
        %v1471 = vunpack.c.h.b16 %v1436
        %v1472 = vunpack.c.l.b16 %v1437
        %v1473 = vunpack.c.h.b16 %v1437
        %v1474 = vunpack.c.l.b16 %v1438
        %v1475 = vunpack.c.h.b16 %v1438
        %v1476 = vunpack.c.l.b16 %v1439
        %v1477 = vunpack.c.h.b16 %v1439
        %v1478 = vunpack.c.l.b16 %v1440
        %v1479 = vunpack.c.h.b16 %v1440
        %v1480 = vunpack.c.l.b16 %v1441
        %v1481 = vunpack.c.h.b16 %v1441
        %v1482 = vunpack.c.l.b16 %v1442
        %v1483 = vunpack.c.h.b16 %v1442
        %v1484 = vunpack.c.l.b16 %v1443
        %v1485 = vunpack.c.h.b16 %v1443
        %v1486 = vunpack.c.l.b16 %v1444
        %v1487 = vunpack.c.h.b16 %v1444
        %v1488 = vunpack.c.l.b16 %v1445
        %v1489 = vunpack.c.h.b16 %v1445
        %v1490 = vunpack.c.l.b16 %v1446
        %v1491 = vunpack.c.h.b16 %v1446
        %v1492 = vunpack.c.l.b16 %v1447
        %v1493 = vunpack.c.h.b16 %v1447
        %v1494 = vunpack.c.l.b16 %v1448
        %v1495 = vunpack.c.h.b16 %v1448
        %v1496 = vunpack.c.l.b16 %v1449
        %v1497 = vunpack.c.h.b16 %v1449
        %v1498 = vpack.c.b16 %v1468, %v1466
        %v1499 = vpack.c.b16 %v1469, %v1467
        %v1500 = vpack.c.b16 %v1472, %v1470
        %v1501 = vpack.c.b16 %v1473, %v1471
        %v1502 = vpack.c.b16 %v1476, %v1474
        %v1503 = vpack.c.b16 %v1477, %v1475
        %v1504 = vpack.c.b16 %v1480, %v1478
        %v1505 = vpack.c.b16 %v1481, %v1479
        %v1506 = vpack.c.b16 %v1484, %v1482
        %v1507 = vpack.c.b16 %v1485, %v1483
        %v1508 = vpack.c.b16 %v1488, %v1486
        %v1509 = vpack.c.b16 %v1489, %v1487
        %v1510 = vpack.c.b16 %v1492, %v1490
        %v1511 = vpack.c.b16 %v1493, %v1491
        %v1512 = vpack.c.b16 %v1496, %v1494
        %v1513 = vpack.c.b16 %v1497, %v1495
        %1530 = vmatprep.subr.bf16.mxu0 %v1513
        %1531 = vmatpush1.bf16.msra.mxu0 %v1512
        %1532 = vmatprep.subr.bf16.mxu0 %v1511
        %1533 = vmatpush1.bf16.msra.mxu0 %v1510
        %1534 = vmatprep.subr.bf16.mxu0 %v1509
        %1535 = vmatpush1.bf16.msra.mxu0 %v1508
        %1536 = vmatprep.subr.bf16.mxu0 %v1507
        %1537 = vmatpush1.bf16.msra.mxu0 %v1506
        %1538 = vmatprep.subr.bf16.mxu0 %v1505
        %1539 = vmatpush1.bf16.msra.mxu0 %v1504
        %1540 = vmatprep.subr.bf16.mxu0 %v1503
        %1541 = vmatpush1.bf16.msra.mxu0 %v1502
        %1542 = vmatprep.subr.bf16.mxu0 %v1501
        %1543 = vmatpush1.bf16.msra.mxu0 %v1500
        %1544 = vmatprep.subr.bf16.mxu0 %v1499
        %1545 = vmatpush1.bf16.msra.mxu0 %v1498
        %1546 = vmatprep.subr.bf16.mxu0 0
        %1547 = vmatpush2.bf16.msra.mxu0 0
        %1548 = vmatprep.subr.bf16.mxu0 0
        %1549 = vmatpush2.bf16.msra.mxu0 0
        %1550 = vmatprep.subr.bf16.mxu0 0
        %1551 = vmatpush2.bf16.msra.mxu0 0
        %1552 = vmatprep.subr.bf16.mxu0 0
        %1553 = vmatpush2.bf16.msra.mxu0 0
        %1554 = vmatprep.subr.bf16.mxu0 0
        %1555 = vmatpush2.bf16.msra.mxu0 0
        %1556 = vmatprep.subr.bf16.mxu0 0
        %1557 = vmatpush2.bf16.msra.mxu0 0
        %1558 = vmatprep.subr.bf16.mxu0 0
        %1559 = vmatpush2.bf16.msra.mxu0 0
        %1560 = vmatprep.subr.bf16.mxu0 0
        %1561 = vmatpush2.bf16.msra.mxu0 0
        %1562 = vmatprep.mubr.bf16.mxu0 0
        %1563 = vmatmul.mubr.bf16.gmra.mxu0 %v1433
        %v1564 = vpop.f32.mrf.mxu0
        %v1565 = vadd.f32 0.0, %v1564
        %v1566 = vpop.f32.mrf.mxu0
        %v1567 = vadd.f32 0.0, %v1566
        %v1568 = vpop.f32.mrf.mxu0
        %v1569 = vadd.f32 0.0, %v1568
        %v1570 = vpop.f32.mrf.mxu0
        %v1571 = vadd.f32 0.0, %v1570
        %1572 = vdwg.mxu0
        %v1573 = vmax.f32 %v1565, 0.0
        %v1574 = vmax.f32 %v1567, 0.0
        %v1575 = vmax.f32 %v1569, 0.0
        %v1576 = vmax.f32 %v1571, 0.0
        %v1577 = vpack.c.bf16 %v1575, %v1573
        %v1578 = vpack.c.bf16 %v1576, %v1574
        %v1579 = vld [vmem:[%s451] sm:$0xf]
        %v1580 = vld [vmem:[%s451 + $0x4] sm:$0xf]
        %v1581 = vld [vmem:[%s451 + $0x8] sm:$0xf]
        %v1582 = vld [vmem:[%s451 + $0xc] sm:$0xf]
        %v1583 = vld [vmem:[%s451 + $0x10] sm:$0xf]
        %v1584 = vld [vmem:[%s451 + $0x14] sm:$0xf]
        %v1585 = vld [vmem:[%s451 + $0x18] sm:$0xf]
        %v1586 = vld [vmem:[%s451 + $0x1c] sm:$0xf]
        %v1587 = vld [vmem:[%s451 + $0x20] sm:$0xf]
        %v1588 = vld [vmem:[%s451 + $0x24] sm:$0xf]
        %v1589 = vld [vmem:[%s451 + $0x28] sm:$0xf]
        %v1590 = vld [vmem:[%s451 + $0x2c] sm:$0xf]
        %v1591 = vld [vmem:[%s451 + $0x30] sm:$0xf]
        %v1592 = vld [vmem:[%s451 + $0x34] sm:$0xf]
        %v1593 = vld [vmem:[%s451 + $0x38] sm:$0xf]
        %v1594 = vld [vmem:[%s451 + $0x3c] sm:$0xf]
        %v1595 = vld [vmem:[%s451 + $0x40] sm:$0xf]
        %v1596 = vld [vmem:[%s451 + $0x44] sm:$0xf]
        %v1597 = vld [vmem:[%s451 + $0x48] sm:$0xf]
        %v1598 = vld [vmem:[%s451 + $0x4c] sm:$0xf]
        %v1599 = vld [vmem:[%s451 + $0x50] sm:$0xf]
        %v1600 = vld [vmem:[%s451 + $0x54] sm:$0xf]
        %v1601 = vld [vmem:[%s451 + $0x58] sm:$0xf]
        %v1602 = vld [vmem:[%s451 + $0x5c] sm:$0xf]
        %v1603 = vld [vmem:[%s451 + $0x60] sm:$0xf]
        %v1604 = vld [vmem:[%s451 + $0x64] sm:$0xf]
        %v1605 = vld [vmem:[%s451 + $0x68] sm:$0xf]
        %v1606 = vld [vmem:[%s451 + $0x6c] sm:$0xf]
        %v1607 = vld [vmem:[%s451 + $0x70] sm:$0xf]
        %v1608 = vld [vmem:[%s451 + $0x74] sm:$0xf]
        %v1609 = vld [vmem:[%s451 + $0x78] sm:$0xf]
        %v1610 = vld [vmem:[%s451 + $0x7c] sm:$0xf]
        %v1643 = vunpack.c.l.b16 %v1579
        %v1644 = vunpack.c.l.b16 %v1580
        %v1645 = vunpack.c.l.b16 %v1581
        %v1646 = vunpack.c.l.b16 %v1582
        %v1647 = vunpack.c.l.b16 %v1583
        %v1648 = vunpack.c.l.b16 %v1584
        %v1649 = vunpack.c.l.b16 %v1585
        %v1650 = vunpack.c.l.b16 %v1586
        %v1651 = vunpack.c.l.b16 %v1587
        %v1652 = vunpack.c.l.b16 %v1588
        %v1653 = vunpack.c.l.b16 %v1589
        %v1654 = vunpack.c.l.b16 %v1590
        %v1655 = vunpack.c.l.b16 %v1591
        %v1656 = vunpack.c.l.b16 %v1592
        %v1657 = vunpack.c.l.b16 %v1593
        %v1658 = vunpack.c.l.b16 %v1594
        %v1659 = vunpack.c.l.b16 %v1595
        %v1660 = vunpack.c.l.b16 %v1596
        %v1661 = vunpack.c.l.b16 %v1597
        %v1662 = vunpack.c.l.b16 %v1598
        %v1663 = vunpack.c.l.b16 %v1599
        %v1664 = vunpack.c.l.b16 %v1600
        %v1665 = vunpack.c.l.b16 %v1601
        %v1666 = vunpack.c.l.b16 %v1602
        %v1667 = vunpack.c.l.b16 %v1603
        %v1668 = vunpack.c.l.b16 %v1604
        %v1669 = vunpack.c.l.b16 %v1605
        %v1670 = vunpack.c.l.b16 %v1606
        %v1671 = vunpack.c.l.b16 %v1607
        %v1672 = vunpack.c.l.b16 %v1608
        %v1673 = vunpack.c.l.b16 %v1609
        %v1674 = vunpack.c.l.b16 %v1610
        %v1675 = vpack.c.b16 %v1644, %v1643
        %v1676 = vpack.c.b16 %v1646, %v1645
        %v1677 = vpack.c.b16 %v1648, %v1647
        %v1678 = vpack.c.b16 %v1650, %v1649
        %v1679 = vpack.c.b16 %v1652, %v1651
        %v1680 = vpack.c.b16 %v1654, %v1653
        %v1681 = vpack.c.b16 %v1656, %v1655
        %v1682 = vpack.c.b16 %v1658, %v1657
        %v1683 = vpack.c.b16 %v1660, %v1659
        %v1684 = vpack.c.b16 %v1662, %v1661
        %v1685 = vpack.c.b16 %v1664, %v1663
        %v1686 = vpack.c.b16 %v1666, %v1665
        %v1687 = vpack.c.b16 %v1668, %v1667
        %v1688 = vpack.c.b16 %v1670, %v1669
        %v1689 = vpack.c.b16 %v1672, %v1671
        %v1690 = vpack.c.b16 %v1674, %v1673
        %1707 = vmatprep.subr.bf16.mxu0 0
        %1708 = vmatpush1.bf16.msra.mxu0 %v1682
        %1709 = vmatprep.subr.bf16.mxu0 0
        %1710 = vmatpush1.bf16.msra.mxu0 %v1681
        %1711 = vmatprep.subr.bf16.mxu0 0
        %1712 = vmatpush1.bf16.msra.mxu0 %v1680
        %1713 = vmatprep.subr.bf16.mxu0 0
        %1714 = vmatpush1.bf16.msra.mxu0 %v1679
        %1715 = vmatprep.subr.bf16.mxu0 0
        %1716 = vmatpush1.bf16.msra.mxu0 %v1678
        %1717 = vmatprep.subr.bf16.mxu0 0
        %1718 = vmatpush1.bf16.msra.mxu0 %v1677
        %1719 = vmatprep.subr.bf16.mxu0 0
        %1720 = vmatpush1.bf16.msra.mxu0 %v1676
        %1721 = vmatprep.subr.bf16.mxu0 0
        %1722 = vmatpush1.bf16.msra.mxu0 %v1675
        %1723 = vmatprep.subr.bf16.mxu0 0
        %1724 = vmatpush2.bf16.msra.mxu0 %v1690
        %1725 = vmatprep.subr.bf16.mxu0 0
        %1726 = vmatpush2.bf16.msra.mxu0 %v1689
        %1727 = vmatprep.subr.bf16.mxu0 0
        %1728 = vmatpush2.bf16.msra.mxu0 %v1688
        %1729 = vmatprep.subr.bf16.mxu0 0
        %1730 = vmatpush2.bf16.msra.mxu0 %v1687
        %1731 = vmatprep.subr.bf16.mxu0 0
        %1732 = vmatpush2.bf16.msra.mxu0 %v1686
        %1733 = vmatprep.subr.bf16.mxu0 0
        %1734 = vmatpush2.bf16.msra.mxu0 %v1685
        %1735 = vmatprep.subr.bf16.mxu0 0
        %1736 = vmatpush2.bf16.msra.mxu0 %v1684
        %1737 = vmatprep.subr.bf16.mxu0 0
        %1738 = vmatpush2.bf16.msra.mxu0 %v1683
        %1739 = vmatprep.mubr.bf16.mxu0 %v1578
        %1740 = vmatmul.mubr.bf16.gmra.mxu0 %v1577
        %v1741 = vpop.f32.mrf.mxu0
        %v1742 = vadd.f32 0.0, %v1741
        %v1743 = vpop.f32.mrf.mxu0
        %v1744 = vpop.f32.mrf.mxu0
        %v1745 = vadd.f32 0.0, %v1744
        %v1746 = vpop.f32.mrf.mxu0
        %1747 = vdwg.mxu0
        %v1748 = vadd.f32 %v1408, %v1742
        %v1749 = vadd.f32 %v1409, %v1745
        %1750 = vst [vmem:[#allocation2] sm:$0xff] %v1748
        %1751 = vst [vmem:[#allocation2 + $0x8] sm:$0xff] %v1749
        %p1752 = scmp.eq.s32.totalorder %s28, 1
        // Predicated region
        $region61: #{text_encoder_forward.1} parent=55 // pred_check
          %p1753 = pneg %p1752
        $region62: #{text_encoder_forward.1} parent=55 // pred_check_branch
          %1755 = sbr.rel (%p1753) target = $region64
        $region63: #{text_encoder_forward.1} parent=55 // pred_region
          %v1756 = vld [vmem:[%s8] sm:$0x1]
          %v1757 = vmul.f32 %v1748, %v1748
          %v1758 = vmul.f32 %v1749, %v1749
          %1759 = vadd.xlane.f32.xlu0 %v1757
          %v1760 = vpop.xlane.xlu0 %1759
          %1761 = vadd.xlane.f32.xlu0 %v1758
          %v1762 = vpop.xlane.xlu0 %1761
          %v1763 = vmul.f32 %v1760, %v470
          %v1764 = vmul.f32 %v1762, %v470
          %v1765 = vadd.f32 %v1763, 1e-06
          %v1766 = vadd.f32 %v1764, 1e-06
          %v1767 = vrsqrt.pop %v1765
          %v1768 = vrsqrt.pop %v1766
          %v1769 = vmul.f32 %v1748, %v1767
          %v1770 = vmul.f32 %v1749, %v1768
          %v1772 = vlaneseq
          %v1773 = vshrl.u32 %v1772, 7
          %v1774 = vsub.s32 0, %v1773
          %v1775 = vrot.slane %v1756, %v1774
          %v1777 = vmul.f32 %v1769, %v1775
          %v1778 = vmul.f32 %v1770, %v1775
          %v1779 = vadd.f32 %v1777, %v1778
          %v1780 = vrot.slane %v1779, 4
          %v1781 = vadd.f32 %v1779, %v1780
          %v1782 = vrot.slane %v1781, 2
          %v1783 = vadd.f32 %v1781, %v1782
          %v1784 = vrot.slane %v1783, 1
          %v1785 = vadd.f32 %v1783, %v1784
          %v1786 = vrcp.pop 16.0
          %v1787 = vmul.f32 %v1785, %v1786
          %1788 = vst [vmem:[%s419] sm:$0x1] %v1787
        $region64: #{text_encoder_forward.1} parent=55 // pred_fallthru
          _
        %s1789 = sand.u32 %s267, 1
        %s1790 = scalar_lea.sflag [#allocation4], %s1789
        %s1791 = sand.u32 %s267, 1
        %s1792 = scalar_lea.vmem [#allocation3], %s1791
        // Predicated region
        $region65: #{text_encoder_forward.1} parent=55 // pred_check
          %p1793 = pneg %p277
        $region66: #{text_encoder_forward.1} parent=55 // pred_check_branch
          %1795 = sbr.rel (%p1793) target = $region68
        $region67: #{text_encoder_forward.1} parent=55 // pred_region
          %s1797 = ssub.s32 16, 16
          %1798 = vsyncadd %s1790, %s1797
          %s1799 = smul.addr %s27, 16
          %s1800 = scalar_lea.hbm %s9, %s1799
          %s1802 = sshll.u32 %s1792, 4
          %s1803 = int_to_ptr.vmem [resolvable:$true] %s1802
          %1805 = dma.vmem_to_hbm [thread:$0]  %s1803, 16, %s1800, %s1790
        $region68: #{text_encoder_forward.1} parent=55 // pred_fallthru
          _
      $region56: #{text_encoder_forward.1} parent=5 // pred_fallthru
        _
      %p1806 = scmp.le.s32.totalorder 2, %s18
      // Predicated region
      $region69: #{text_encoder_forward.1} parent=5 // pred_check
        %p1807 = pneg %p1806
      $region70: #{text_encoder_forward.1} parent=5 // pred_check_branch
        %1809 = sbr.rel (%p1807) target = $region72
      $region71: #{text_encoder_forward.1} parent=5 // pred_region
        %s1810 = ssub.s32 %s18, 2
        // Predicated region
        $region73: #{text_encoder_forward.1} parent=71 // pred_check
          %p1811 = pneg %p283
        $region74: #{text_encoder_forward.1} parent=71 // pred_check_branch
          %1813 = sbr.rel (%p1811) target = $region76
        $region75: #{text_encoder_forward.1} parent=71 // pred_region
          %s1814 = sand.u32 %s268, 1
          %s1815 = scalar_lea.sflag [#allocation4], %s1814
          %s1816 = sand.u32 %s268, 1
          %s1817 = scalar_lea.vmem [#allocation3], %s1816
          %1818 = dma.done %s1815, 16
        $region76: #{text_encoder_forward.1} parent=71 // pred_fallthru
          _
      $region72: #{text_encoder_forward.1} parent=5 // pred_fallthru
        _
    $region6: #{text_encoder_forward.1} parent=1 // loop_footer
      %s22 = sadd.s32 1, %s18
    $region7: #{text_encoder_forward.1} parent=1 // loop_footer_branch
      %17 = sbr.rel target = $region3
    $region8: #{text_encoder_forward.1} parent=1 // loop_exit
      _
    %1819 = vsyncpa [#allocation4], 1
    %s1820 = scalar_lea.sflag [#allocation4], 1
    %1821 = vsyncpa %s1820, 1

</llo_original>
